<compile_context>
chip_gen: v7x
topology: tpu7x:2x2x1
jax: 0.10.0
libtpu: 0.0.40
codegen_flags: <defaults>
</compile_context>

<pallas_src>
import functools

import jax
import jax.numpy as jnp
import numpy as np
from jax.experimental import pallas as pl
from jax.experimental.pallas import tpu as pltpu

INPUT_DIM = 8 * 6 * 2          # 96 (logical, fed unpadded to the kernel)
H1, H2, H3 = 512, 512, 256
OUT = 1                        # logical output width
OUT_PAD = 128                  # lane-dense padded output width
NEG_SLOPE = 0.01               # F.leaky_relu default
TM_MAX = 2048                  # max batch tile (multiple of 16)
VMEM_LIMIT_BYTES = 48 * 1024 * 1024  # above scoped defaults, below physical on all gens


def _cdiv(a, b):
    return -(-a // b)


def _round_up(x, m):
    return _cdiv(x, m) * m


def _choose_tile(batch, tm_max):
    """Balanced batch tile: multiple of 16, <= tm_max, >=2 tiles for big B."""
    n_tiles = max(1, _cdiv(batch, tm_max))
    # Guarantee >=2 grid steps for moderately large batches so both v7x
    # TensorCores get work (harmless single extra step on v5e/v6e).
    if n_tiles == 1 and batch > 256:
        n_tiles = 2
    tm = _round_up(_cdiv(batch, n_tiles), 16)
    b_pad = _round_up(batch, tm)
    return tm, b_pad


def discriminator_kernel(x_ref,
                         w1_ref, b1_ref,
                         w2_ref, b2_ref,
                         w3_ref, b3_ref,
                         w4_ref, b4_ref,
                         o_ref):
    # x_ref: (tm, 96) f32 (pad/cast fused here).  Weights bf16, hidden biases
    # bf16, final bias f32.  MXU accumulates in f32; activations run as
    # max-form leaky-relu in bf16 (cheap on the VALU slot).
    x = x_ref[...].astype(jnp.bfloat16)

    h = jnp.dot(x, w1_ref[...], preferred_element_type=jnp.float32)
    h = h.astype(jnp.bfloat16) + b1_ref[...]
    h = jnp.maximum(h, NEG_SLOPE * h)

    h = jnp.dot(h, w2_ref[...], preferred_element_type=jnp.float32)
    h = h.astype(jnp.bfloat16) + b2_ref[...]
    h = jnp.maximum(h, NEG_SLOPE * h)

    h = jnp.dot(h, w3_ref[...], preferred_element_type=jnp.float32)
    h = h.astype(jnp.bfloat16) + b3_ref[...]
    h = jnp.maximum(h, NEG_SLOPE * h)

    h = jnp.dot(h, w4_ref[...], preferred_element_type=jnp.float32) + b4_ref[...]
    o_ref[...] = h.astype(o_ref.dtype)


def prepare_params(params):
    """Cast weights + hidden biases to bf16, keep final bias f32, pad N 1->128."""
    (w1, b1), (w2, b2), (w3, b3), (w4, b4) = params
    w4p = jnp.pad(w4, ((0, 0), (0, OUT_PAD - OUT))).astype(jnp.bfloat16)
    b4p = jnp.pad(b4, ((0, 0), (0, OUT_PAD - OUT))).astype(jnp.float32)
    return (
        (w1.astype(jnp.bfloat16), b1.astype(jnp.bfloat16)),
        (w2.astype(jnp.bfloat16), b2.astype(jnp.bfloat16)),
        (w3.astype(jnp.bfloat16), b3.astype(jnp.bfloat16)),
        (w4p, b4p),
    )


@functools.partial(jax.jit, static_argnames=("tm_max",))
def discriminator_forward(x, padded_params, *, tm_max=TM_MAX):
    (w1, b1), (w2, b2), (w3, b3), (w4, b4) = padded_params
    B = x.shape[0]
    x = x.astype(jnp.float32)

    tm, b_pad = _choose_tile(B, tm_max)
    if b_pad != B:
        x = jnp.pad(x, ((0, b_pad - B), (0, 0)))
    grid = (b_pad // tm,)

    const = lambda i: (0, 0)  # weights/biases: same block every step -> resident in VMEM
    in_specs = [
        pl.BlockSpec((tm, INPUT_DIM), lambda i: (i, 0)),   # x tile walks the batch, f32, full 96-wide last dim
        pl.BlockSpec((INPUT_DIM, H1), const), pl.BlockSpec((1, H1), const),
        pl.BlockSpec((H1, H2), const),        pl.BlockSpec((1, H2), const),
        pl.BlockSpec((H2, H3), const),        pl.BlockSpec((1, H3), const),
        pl.BlockSpec((H3, OUT_PAD), const),   pl.BlockSpec((1, OUT_PAD), const),
    ]
    out_spec = pl.BlockSpec((tm, OUT_PAD), lambda i: (i, 0))

    flops = 2 * b_pad * (INPUT_DIM * H1 + H1 * H2 + H2 * H3 + H3 * OUT_PAD)
    bytes_accessed = (
        b_pad * INPUT_DIM * 4                                        # x (f32)
        + (INPUT_DIM * H1 + H1 * H2 + H2 * H3 + H3 * OUT_PAD) * 2    # weights (bf16)
        + (H1 + H2 + H3) * 2 + OUT_PAD * 4                           # biases
        + b_pad * OUT_PAD * 4                                        # output (f32)
    )

    out = pl.pallas_call(
        discriminator_kernel,
        out_shape=jax.ShapeDtypeStruct((b_pad, OUT_PAD), jnp.float32),
        grid=grid,
        in_specs=in_specs,
        out_specs=out_spec,
        compiler_params=pltpu.CompilerParams(
            dimension_semantics=("parallel",),
            vmem_limit_bytes=VMEM_LIMIT_BYTES),
        cost_estimate=pl.CostEstimate(
            flops=flops, transcendentals=0, bytes_accessed=bytes_accessed),
    )(x, w1, b1, w2, b2, w3, b3, w4, b4)

    return out[:B, :OUT]


def kaiming_uniform(key, fan_in, fan_out):
    # Matches the module's weights_init:
    # kaiming_uniform_(a=0, mode='fan_in', nonlinearity='leaky_relu'):
    # gain = sqrt(2); bound = gain * sqrt(3 / fan_in) = sqrt(6 / fan_in)
    bound = np.sqrt(6.0 / fan_in)
    # stored as [in, out] (transpose of PyTorch's [out, in]) so each layer is x @ W
    return jax.random.uniform(key, (fan_in, fan_out), jnp.float32,
                              minval=-bound, maxval=bound)


def init_params(key):
    dims = [(INPUT_DIM, H1), (H1, H2), (H2, H3), (H3, OUT)]
    keys = jax.random.split(key, len(dims))
    params = []
    for k, (fin, fout) in zip(keys, dims):
        w = kaiming_uniform(k, fin, fout)
        b = jnp.full((1, fout), 0.01, dtype=jnp.float32)  # nn.init.constant_(bias, 0.01)
        params.append((w, b))
    return params


def reference_forward(x, padded_params):
    # Pure-JAX mirror of the kernel numerics (bf16 weights/activations,
    # f32 MXU accumulation, max-form bf16 leaky-relu, f32 final layer).
    (w1, b1), (w2, b2), (w3, b3), (w4, b4) = padded_params
    h = x.astype(jnp.bfloat16)
    for w, b in ((w1, b1), (w2, b2), (w3, b3)):
        a = jnp.dot(h, w, preferred_element_type=jnp.float32).astype(jnp.bfloat16) + b
        h = jnp.maximum(a, NEG_SLOPE * a)
    out = jnp.dot(h, w4, preferred_element_type=jnp.float32) + b4
    return out[:, :OUT]


if __name__ == "__main__":
    key = jax.random.PRNGKey(0)
    k_param, k_x = jax.random.split(key)

    params = init_params(k_param)
    padded_params = prepare_params(params)

    B = 8
    x = jax.random.normal(k_x, (B, INPUT_DIM), dtype=jnp.float32)

    out = discriminator_forward(x, padded_params)
    out = jax.block_until_ready(out)

    ref = reference_forward(x, padded_params)
    np.testing.assert_allclose(np.asarray(out), np.asarray(ref),
                               rtol=2e-2, atol=2e-2)
    assert out.shape == (B, OUT)
    print("KERNEL_OK")
</pallas_src>

<mosaic_0001>
module attributes {stable_mosaic.version = 11 : i64} {
  func.func @discriminator_kernel(%arg0: i32, %arg1: memref<16x96xf32, #tpu.memory_space<vmem>>, %arg2: memref<96x512xbf16, #tpu.memory_space<vmem>>, %arg3: memref<1x512xbf16, #tpu.memory_space<vmem>>, %arg4: memref<512x512xbf16, #tpu.memory_space<vmem>>, %arg5: memref<1x512xbf16, #tpu.memory_space<vmem>>, %arg6: memref<512x256xbf16, #tpu.memory_space<vmem>>, %arg7: memref<1x256xbf16, #tpu.memory_space<vmem>>, %arg8: memref<256x128xbf16, #tpu.memory_space<vmem>>, %arg9: memref<1x128xf32, #tpu.memory_space<vmem>>, %arg10: memref<16x128xf32, #tpu.memory_space<vmem>>) attributes {dimension_semantics = [#tpu.dimension_semantics<parallel>], iteration_bounds = array<i64: 1>, scalar_prefetch = 0 : i64, scratch_operands = 0 : i64, tpu.core_type = #tpu.core_type<tc>, window_params = [{transform_indices = @transform_0, window_bounds = array<i64: 16, 96>}, {pipeline_mode = #tpu.pipeline_mode<synchronous>, transform_indices = @transform_1, window_bounds = array<i64: 96, 512>}, {pipeline_mode = #tpu.pipeline_mode<synchronous>, transform_indices = @transform_2, window_bounds = array<i64: 1, 512>}, {pipeline_mode = #tpu.pipeline_mode<synchronous>, transform_indices = @transform_3, window_bounds = array<i64: 512, 512>}, {pipeline_mode = #tpu.pipeline_mode<synchronous>, transform_indices = @transform_4, window_bounds = array<i64: 1, 512>}, {pipeline_mode = #tpu.pipeline_mode<synchronous>, transform_indices = @transform_5, window_bounds = array<i64: 512, 256>}, {pipeline_mode = #tpu.pipeline_mode<synchronous>, transform_indices = @transform_6, window_bounds = array<i64: 1, 256>}, {pipeline_mode = #tpu.pipeline_mode<synchronous>, transform_indices = @transform_7, window_bounds = array<i64: 256, 128>}, {pipeline_mode = #tpu.pipeline_mode<synchronous>, transform_indices = @transform_8, window_bounds = array<i64: 1, 128>}, {transform_indices = @transform_9, window_bounds = array<i64: 16, 128>}]} {
    %c0 = arith.constant 0 : index
    %c0_0 = arith.constant 0 : index
    %0 = vector.load %arg1[%c0, %c0_0] : memref<16x96xf32, #tpu.memory_space<vmem>>, vector<16x96xf32>
    %1 = arith.truncf %0 : vector<16x96xf32> to vector<16x96xbf16>
    %c0_1 = arith.constant 0 : index
    %c0_2 = arith.constant 0 : index
    %2 = vector.load %arg2[%c0_1, %c0_2] : memref<96x512xbf16, #tpu.memory_space<vmem>>, vector<96x512xbf16>
    %cst = arith.constant dense<0.000000e+00> : vector<16x512xf32>
    %3 = tpu.matmul %1, %2, %cst {dimension_numbers = #tpu.dot_dimension_numbers<[1], [0], [0], [1], [0, 0, 1, 1], [], []>} : vector<16x96xbf16>, vector<96x512xbf16>, vector<16x512xf32> -> vector<16x512xf32>
    %4 = arith.truncf %3 : vector<16x512xf32> to vector<16x512xbf16>
    %c0_3 = arith.constant 0 : index
    %c0_4 = arith.constant 0 : index
    %5 = vector.load %arg3[%c0_3, %c0_4] : memref<1x512xbf16, #tpu.memory_space<vmem>>, vector<1x512xbf16>
    %6 = vector.broadcast %5 : vector<1x512xbf16> to vector<16x512xbf16>
    %7 = arith.addf %4, %6 : vector<16x512xbf16>
    %cst_5 = arith.constant 1.000980e-02 : bf16
    %8 = vector.broadcast %cst_5 : bf16 to vector<16x512xbf16>
    %9 = arith.mulf %8, %7 : vector<16x512xbf16>
    %10 = arith.maximumf %7, %9 : vector<16x512xbf16>
    %c0_6 = arith.constant 0 : index
    %c0_7 = arith.constant 0 : index
    %11 = vector.load %arg4[%c0_6, %c0_7] : memref<512x512xbf16, #tpu.memory_space<vmem>>, vector<512x512xbf16>
    %cst_8 = arith.constant dense<0.000000e+00> : vector<16x512xf32>
    %12 = tpu.matmul %10, %11, %cst_8 {dimension_numbers = #tpu.dot_dimension_numbers<[1], [0], [0], [1], [0, 0, 1, 1], [], []>} : vector<16x512xbf16>, vector<512x512xbf16>, vector<16x512xf32> -> vector<16x512xf32>
    %13 = arith.truncf %12 : vector<16x512xf32> to vector<16x512xbf16>
    %c0_9 = arith.constant 0 : index
    %c0_10 = arith.constant 0 : index
    %14 = vector.load %arg5[%c0_9, %c0_10] : memref<1x512xbf16, #tpu.memory_space<vmem>>, vector<1x512xbf16>
    %15 = vector.broadcast %14 : vector<1x512xbf16> to vector<16x512xbf16>
    %16 = arith.addf %13, %15 : vector<16x512xbf16>
    %cst_11 = arith.constant 1.000980e-02 : bf16
    %17 = vector.broadcast %cst_11 : bf16 to vector<16x512xbf16>
    %18 = arith.mulf %17, %16 : vector<16x512xbf16>
    %19 = arith.maximumf %16, %18 : vector<16x512xbf16>
    %c0_12 = arith.constant 0 : index
    %c0_13 = arith.constant 0 : index
    %20 = vector.load %arg6[%c0_12, %c0_13] : memref<512x256xbf16, #tpu.memory_space<vmem>>, vector<512x256xbf16>
    %cst_14 = arith.constant dense<0.000000e+00> : vector<16x256xf32>
    %21 = tpu.matmul %19, %20, %cst_14 {dimension_numbers = #tpu.dot_dimension_numbers<[1], [0], [0], [1], [0, 0, 1, 1], [], []>} : vector<16x512xbf16>, vector<512x256xbf16>, vector<16x256xf32> -> vector<16x256xf32>
    %22 = arith.truncf %21 : vector<16x256xf32> to vector<16x256xbf16>
    %c0_15 = arith.constant 0 : index
    %c0_16 = arith.constant 0 : index
    %23 = vector.load %arg7[%c0_15, %c0_16] : memref<1x256xbf16, #tpu.memory_space<vmem>>, vector<1x256xbf16>
    %24 = vector.broadcast %23 : vector<1x256xbf16> to vector<16x256xbf16>
    %25 = arith.addf %22, %24 : vector<16x256xbf16>
    %cst_17 = arith.constant 1.000980e-02 : bf16
    %26 = vector.broadcast %cst_17 : bf16 to vector<16x256xbf16>
    %27 = arith.mulf %26, %25 : vector<16x256xbf16>
    %28 = arith.maximumf %25, %27 : vector<16x256xbf16>
    %c0_18 = arith.constant 0 : index
    %c0_19 = arith.constant 0 : index
    %29 = vector.load %arg8[%c0_18, %c0_19] : memref<256x128xbf16, #tpu.memory_space<vmem>>, vector<256x128xbf16>
    %cst_20 = arith.constant dense<0.000000e+00> : vector<16x128xf32>
    %30 = tpu.matmul %28, %29, %cst_20 {dimension_numbers = #tpu.dot_dimension_numbers<[1], [0], [0], [1], [0, 0, 1, 1], [], []>} : vector<16x256xbf16>, vector<256x128xbf16>, vector<16x128xf32> -> vector<16x128xf32>
    %c0_21 = arith.constant 0 : index
    %c0_22 = arith.constant 0 : index
    %31 = vector.load %arg9[%c0_21, %c0_22] : memref<1x128xf32, #tpu.memory_space<vmem>>, vector<1x128xf32>
    %32 = vector.broadcast %31 : vector<1x128xf32> to vector<16x128xf32>
    %33 = arith.addf %30, %32 : vector<16x128xf32>
    %c0_23 = arith.constant 0 : index
    %c0_24 = arith.constant 0 : index
    %34 = vector.load %arg10[%c0_23, %c0_24] : memref<16x128xf32, #tpu.memory_space<vmem>>, vector<16x128xf32>
    tpu.vector_store %arg10[%c0_23, %c0_24], %33 {strides = array<i32>} : memref<16x128xf32, #tpu.memory_space<vmem>>, vector<16x128xf32>,
    return
  }
  func.func @transform_0(%arg0: i32) -> (i32, i32) {
    %c0_i32 = arith.constant 0 : i32
    %c0_i32_0 = arith.constant 0 : i32
    return %arg0, %c0_i32 : i32, i32
  }
  func.func @transform_1(%arg0: i32) -> (i32, i32) {
    %c0_i32 = arith.constant 0 : i32
    %c0_i32_0 = arith.constant 0 : i32
    %c0_i32_1 = arith.constant 0 : i32
    return %c0_i32, %c0_i32_0 : i32, i32
  }
  func.func @transform_2(%arg0: i32) -> (i32, i32) {
    %c0_i32 = arith.constant 0 : i32
    %c0_i32_0 = arith.constant 0 : i32
    %c0_i32_1 = arith.constant 0 : i32
    return %c0_i32, %c0_i32_0 : i32, i32
  }
  func.func @transform_3(%arg0: i32) -> (i32, i32) {
    %c0_i32 = arith.constant 0 : i32
    %c0_i32_0 = arith.constant 0 : i32
    %c0_i32_1 = arith.constant 0 : i32
    return %c0_i32, %c0_i32_0 : i32, i32
  }
  func.func @transform_4(%arg0: i32) -> (i32, i32) {
    %c0_i32 = arith.constant 0 : i32
    %c0_i32_0 = arith.constant 0 : i32
    %c0_i32_1 = arith.constant 0 : i32
    return %c0_i32, %c0_i32_0 : i32, i32
  }
  func.func @transform_5(%arg0: i32) -> (i32, i32) {
    %c0_i32 = arith.constant 0 : i32
    %c0_i32_0 = arith.constant 0 : i32
    %c0_i32_1 = arith.constant 0 : i32
    return %c0_i32, %c0_i32_0 : i32, i32
  }
  func.func @transform_6(%arg0: i32) -> (i32, i32) {
    %c0_i32 = arith.constant 0 : i32
    %c0_i32_0 = arith.constant 0 : i32
    %c0_i32_1 = arith.constant 0 : i32
    return %c0_i32, %c0_i32_0 : i32, i32
  }
  func.func @transform_7(%arg0: i32) -> (i32, i32) {
    %c0_i32 = arith.constant 0 : i32
    %c0_i32_0 = arith.constant 0 : i32
    %c0_i32_1 = arith.constant 0 : i32
    return %c0_i32, %c0_i32_0 : i32, i32
  }
  func.func @transform_8(%arg0: i32) -> (i32, i32) {
    %c0_i32 = arith.constant 0 : i32
    %c0_i32_0 = arith.constant 0 : i32
    %c0_i32_1 = arith.constant 0 : i32
    return %c0_i32, %c0_i32_0 : i32, i32
  }
  func.func @transform_9(%arg0: i32) -> (i32, i32) {
    %c0_i32 = arith.constant 0 : i32
    %c0_i32_0 = arith.constant 0 : i32
    return %arg0, %c0_i32 : i32, i32
  }
}

</mosaic_0001>

<llo_original>
// kernel: discriminator_forward.1
$region0: #{discriminator_forward.1}
  #allocation0 [shape = 'u32[]', space=smem, size = 0x4, offset = 0x4, fixed_abs, tag = 'smem constant byte address 0x4 - core index']
  #allocation1 [shape = 'u32[144,128]{1,0:T(1,128)}', space=vmem, size = 0x12000, scoped, tag = 'internal scratch']
  %s0 = inlined_call_operand.vmem [shape: f32[16,96], index: 0, kind: input, shape index: {}]
  %s1 = inlined_call_operand.hbm [shape: bf16[96,512], index: 1, kind: input, shape index: {}]
  %s2 = inlined_call_operand.vmem [shape: bf16[1,512], index: 2, kind: input, shape index: {}]
  %s3 = inlined_call_operand.hbm [shape: bf16[512,512], index: 3, kind: input, shape index: {}]
  %s4 = inlined_call_operand.vmem [shape: bf16[1,512], index: 4, kind: input, shape index: {}]
  %s5 = inlined_call_operand.hbm [shape: bf16[512,256], index: 5, kind: input, shape index: {}]
  %s6 = inlined_call_operand.vmem [shape: bf16[1,256], index: 6, kind: input, shape index: {}]
  %s7 = inlined_call_operand.hbm [shape: bf16[256,128], index: 7, kind: input, shape index: {}]
  %s8 = inlined_call_operand.vmem [shape: f32[1,128], index: 8, kind: input, shape index: {}]
  %s9 = inlined_call_operand.vmem [shape: f32[16,128], index: 9, kind: output, shape index: {}]
  %s10 = sld [smem:[#allocation0]]
  $region62: #{discriminator_forward.1} parent=0
    _
  %s12 = ssub.s32 1, %s10
  %s13 = scalar_select 0, %s12, %s10
  $region1: #{discriminator_forward.1} parent=0
    #allocation2 [shape = 'u8[98304]{0}', space=vmem, size = 0x18000, scoped, tag = 'input window, operand 1, single buffered']
    #allocation3 [shape = 's32[1]{0}', space=sflag, size = 0x4, scoped, tag = 'scoped memory for discriminator_forward.1']
    #allocation4 [shape = 'u8[524288]{0}', space=vmem, size = 0x80000, scoped, tag = 'input window, operand 3, single buffered']
    #allocation5 [shape = 's32[1]{0}', space=sflag, size = 0x4, scoped, tag = 'scoped memory for discriminator_forward.1']
    #allocation6 [shape = 'u8[262144]{0}', space=vmem, size = 0x40000, scoped, tag = 'input window, operand 5, single buffered']
    #allocation7 [shape = 'u8[65536]{0}', space=vmem, size = 0x10000, scoped, tag = 'input window, operand 7, single buffered']
    #allocation8 [shape = 's32[1]{0}', space=sflag, size = 0x4, scoped, tag = 'scoped memory for discriminator_forward.1']
    %14 = vsyncpa [#allocation3], 0
    %15 = vsyncpa [#allocation5], 0
    %16 = vsyncpa [#allocation8], 0
    // Predicated region
    $region2: #{discriminator_forward.1} parent=1 // pred_check
      _
    $region3: #{discriminator_forward.1} parent=1 // pred_check_branch
      %18 = sbr.rel (0) target = $region5
    $region4: #{discriminator_forward.1} parent=1 // pred_region
      _
    $region5: #{discriminator_forward.1} parent=1 // pred_fallthru
      _
    // Predicated region
    $region6: #{discriminator_forward.1} parent=1 // pred_check
      _
    $region7: #{discriminator_forward.1} parent=1 // pred_check_branch
      %20 = sbr.rel (0) target = $region9
    $region8: #{discriminator_forward.1} parent=1 // pred_region
      %s22 = ssub.s32 3072, 3072
      %23 = vsyncadd [#allocation3], %s22
      %s24 = sshll.u32 [#allocation2], 4
      %s25 = int_to_ptr.vmem [resolvable:$true] %s24
      %30 = dma.hbm_to_vmem [thread:$0]  %s1, 3072, %s25, [#allocation3], 256, 256, 16
    $region9: #{discriminator_forward.1} parent=1 // pred_fallthru
      _
    // Predicated region
    $region10: #{discriminator_forward.1} parent=1 // pred_check
      _
    $region11: #{discriminator_forward.1} parent=1 // pred_check_branch
      %32 = sbr.rel (0) target = $region13
    $region12: #{discriminator_forward.1} parent=1 // pred_region
      _
    $region13: #{discriminator_forward.1} parent=1 // pred_fallthru
      _
    // Predicated region
    $region14: #{discriminator_forward.1} parent=1 // pred_check
      _
    $region15: #{discriminator_forward.1} parent=1 // pred_check_branch
      %34 = sbr.rel (0) target = $region17
    $region16: #{discriminator_forward.1} parent=1 // pred_region
      %s36 = ssub.s32 16384, 16384
      %37 = vsyncadd [#allocation5], %s36
      %s38 = sshll.u32 [#allocation4], 4
      %s39 = int_to_ptr.vmem [resolvable:$true] %s38
      %44 = dma.hbm_to_vmem [thread:$0]  %s3, 16384, %s39, [#allocation5], 256, 256, 16
    $region17: #{discriminator_forward.1} parent=1 // pred_fallthru
      _
    // Predicated region
    $region18: #{discriminator_forward.1} parent=1 // pred_check
      _
    $region19: #{discriminator_forward.1} parent=1 // pred_check_branch
      %46 = sbr.rel (0) target = $region21
    $region20: #{discriminator_forward.1} parent=1 // pred_region
      _
    $region21: #{discriminator_forward.1} parent=1 // pred_fallthru
      _
    // Predicated region
    $region22: #{discriminator_forward.1} parent=1 // pred_check
      _
    $region23: #{discriminator_forward.1} parent=1 // pred_check_branch
      %48 = sbr.rel (0) target = $region25
    $region24: #{discriminator_forward.1} parent=1 // pred_region
      %s50 = ssub.s32 8192, 8192
      %51 = vsyncadd [#allocation5], %s50
      %s52 = sshll.u32 [#allocation6], 4
      %s53 = int_to_ptr.vmem [resolvable:$true] %s52
      %58 = dma.hbm_to_vmem [thread:$0]  %s5, 8192, %s53, [#allocation5], 128, 128, 8
    $region25: #{discriminator_forward.1} parent=1 // pred_fallthru
      _
    // Predicated region
    $region26: #{discriminator_forward.1} parent=1 // pred_check
      _
    $region27: #{discriminator_forward.1} parent=1 // pred_check_branch
      %60 = sbr.rel (0) target = $region29
    $region28: #{discriminator_forward.1} parent=1 // pred_region
      _
    $region29: #{discriminator_forward.1} parent=1 // pred_fallthru
      _
    // Predicated region
    $region30: #{discriminator_forward.1} parent=1 // pred_check
      _
    $region31: #{discriminator_forward.1} parent=1 // pred_check_branch
      %62 = sbr.rel (0) target = $region33
    $region32: #{discriminator_forward.1} parent=1 // pred_region
      %s64 = ssub.s32 2048, 2048
      %65 = vsyncadd [#allocation8], %s64
      %s66 = sshll.u32 [#allocation7], 4
      %s67 = int_to_ptr.vmem [resolvable:$true] %s66
      %72 = dma.hbm_to_vmem [thread:$0]  %s7, 2048, %s67, [#allocation8], 64, 64, 4
    $region33: #{discriminator_forward.1} parent=1 // pred_fallthru
      _
    // Predicated region
    $region34: #{discriminator_forward.1} parent=1 // pred_check
      _
    $region35: #{discriminator_forward.1} parent=1 // pred_check_branch
      %74 = sbr.rel (0) target = $region37
    $region36: #{discriminator_forward.1} parent=1 // pred_region
      _
    $region37: #{discriminator_forward.1} parent=1 // pred_fallthru
      _
    // Predicated region
    $region38: #{discriminator_forward.1} parent=1 // pred_check
      _
    $region39: #{discriminator_forward.1} parent=1 // pred_check_branch
      %76 = sbr.rel (0) target = $region41
    $region40: #{discriminator_forward.1} parent=1 // pred_region
      %77 = dma.done [#allocation3], 3072
    $region41: #{discriminator_forward.1} parent=1 // pred_fallthru
      _
    // Predicated region
    $region42: #{discriminator_forward.1} parent=1 // pred_check
      _
    $region43: #{discriminator_forward.1} parent=1 // pred_check_branch
      %79 = sbr.rel (0) target = $region45
    $region44: #{discriminator_forward.1} parent=1 // pred_region
      %80 = dma.done [#allocation5], 16384
    $region45: #{discriminator_forward.1} parent=1 // pred_fallthru
      _
    // Predicated region
    $region46: #{discriminator_forward.1} parent=1 // pred_check
      _
    $region47: #{discriminator_forward.1} parent=1 // pred_check_branch
      %82 = sbr.rel (0) target = $region49
    $region48: #{discriminator_forward.1} parent=1 // pred_region
      %83 = dma.done [#allocation5], 8192
    $region49: #{discriminator_forward.1} parent=1 // pred_fallthru
      _
    // Predicated region
    $region50: #{discriminator_forward.1} parent=1 // pred_check
      _
    $region51: #{discriminator_forward.1} parent=1 // pred_check_branch
      %85 = sbr.rel (0) target = $region53
    $region52: #{discriminator_forward.1} parent=1 // pred_region
      %86 = dma.done [#allocation8], 2048
    $region53: #{discriminator_forward.1} parent=1 // pred_fallthru
      _
    %v89 = vld [vmem:[%s0] sm:$0xff]
    %v90 = vld [vmem:[%s0 + $0x8] sm:$0xff]
    %v91 = vpack.c.bf16 %v90, %v89
    %v92 = vld [vmem:[#allocation2] sm:$0xff]
    %v93 = vld [vmem:[#allocation2 + $0x8] sm:$0xff]
    %v94 = vld [vmem:[#allocation2 + $0x10] sm:$0xff]
    %v95 = vld [vmem:[#allocation2 + $0x18] sm:$0xff]
    %v96 = vld [vmem:[#allocation2 + $0x20] sm:$0xff]
    %v97 = vld [vmem:[#allocation2 + $0x28] sm:$0xff]
    %v98 = vld [vmem:[#allocation2 + $0x30] sm:$0xff]
    %v99 = vld [vmem:[#allocation2 + $0x38] sm:$0xff]
    %v100 = vld [vmem:[#allocation2 + $0x40] sm:$0xff]
    %v101 = vld [vmem:[#allocation2 + $0x48] sm:$0xff]
    %v102 = vld [vmem:[#allocation2 + $0x50] sm:$0xff]
    %v103 = vld [vmem:[#allocation2 + $0x58] sm:$0xff]
    %v104 = vld [vmem:[#allocation2 + $0x60] sm:$0xff]
    %v105 = vld [vmem:[#allocation2 + $0x68] sm:$0xff]
    %v106 = vld [vmem:[#allocation2 + $0x70] sm:$0xff]
    %v107 = vld [vmem:[#allocation2 + $0x78] sm:$0xff]
    %v108 = vld [vmem:[#allocation2 + $0x80] sm:$0xff]
    %v109 = vld [vmem:[#allocation2 + $0x88] sm:$0xff]
    %v110 = vld [vmem:[#allocation2 + $0x90] sm:$0xff]
    %v111 = vld [vmem:[#allocation2 + $0x98] sm:$0xff]
    %v112 = vld [vmem:[#allocation2 + $0xa0] sm:$0xff]
    %v113 = vld [vmem:[#allocation2 + $0xa8] sm:$0xff]
    %v114 = vld [vmem:[#allocation2 + $0xb0] sm:$0xff]
    %v115 = vld [vmem:[#allocation2 + $0xb8] sm:$0xff]
    %v140 = vunpack.c.l.b16 %v92
    %v141 = vunpack.c.h.b16 %v92
    %v142 = vunpack.c.l.b16 %v93
    %v143 = vunpack.c.h.b16 %v93
    %v144 = vunpack.c.l.b16 %v94
    %v145 = vunpack.c.h.b16 %v94
    %v146 = vunpack.c.l.b16 %v95
    %v147 = vunpack.c.h.b16 %v95
    %v148 = vunpack.c.l.b16 %v96
    %v149 = vunpack.c.h.b16 %v96
    %v150 = vunpack.c.l.b16 %v97
    %v151 = vunpack.c.h.b16 %v97
    %v152 = vunpack.c.l.b16 %v98
    %v153 = vunpack.c.h.b16 %v98
    %v154 = vunpack.c.l.b16 %v99
    %v155 = vunpack.c.h.b16 %v99
    %v156 = vunpack.c.l.b16 %v100
    %v157 = vunpack.c.h.b16 %v100
    %v158 = vunpack.c.l.b16 %v101
    %v159 = vunpack.c.h.b16 %v101
    %v160 = vunpack.c.l.b16 %v102
    %v161 = vunpack.c.h.b16 %v102
    %v162 = vunpack.c.l.b16 %v103
    %v163 = vunpack.c.h.b16 %v103
    %v164 = vunpack.c.l.b16 %v104
    %v165 = vunpack.c.h.b16 %v104
    %v166 = vunpack.c.l.b16 %v105
    %v167 = vunpack.c.h.b16 %v105
    %v168 = vunpack.c.l.b16 %v106
    %v169 = vunpack.c.h.b16 %v106
    %v170 = vunpack.c.l.b16 %v107
    %v171 = vunpack.c.h.b16 %v107
    %v172 = vunpack.c.l.b16 %v108
    %v173 = vunpack.c.h.b16 %v108
    %v174 = vunpack.c.l.b16 %v109
    %v175 = vunpack.c.h.b16 %v109
    %v176 = vunpack.c.l.b16 %v110
    %v177 = vunpack.c.h.b16 %v110
    %v178 = vunpack.c.l.b16 %v111
    %v179 = vunpack.c.h.b16 %v111
    %v180 = vunpack.c.l.b16 %v112
    %v181 = vunpack.c.h.b16 %v112
    %v182 = vunpack.c.l.b16 %v113
    %v183 = vunpack.c.h.b16 %v113
    %v184 = vunpack.c.l.b16 %v114
    %v185 = vunpack.c.h.b16 %v114
    %v186 = vunpack.c.l.b16 %v115
    %v187 = vunpack.c.h.b16 %v115
    %v188 = vpack.c.b16 %v144, %v140
    %v189 = vpack.c.b16 %v145, %v141
    %v190 = vpack.c.b16 %v146, %v142
    %v191 = vpack.c.b16 %v147, %v143
    %v192 = vpack.c.b16 %v152, %v148
    %v193 = vpack.c.b16 %v153, %v149
    %v194 = vpack.c.b16 %v154, %v150
    %v195 = vpack.c.b16 %v155, %v151
    %v196 = vpack.c.b16 %v160, %v156
    %v197 = vpack.c.b16 %v161, %v157
    %v198 = vpack.c.b16 %v162, %v158
    %v199 = vpack.c.b16 %v163, %v159
    %v200 = vpack.c.b16 %v168, %v164
    %v201 = vpack.c.b16 %v169, %v165
    %v202 = vpack.c.b16 %v170, %v166
    %v203 = vpack.c.b16 %v171, %v167
    %v204 = vpack.c.b16 %v176, %v172
    %v205 = vpack.c.b16 %v177, %v173
    %v206 = vpack.c.b16 %v178, %v174
    %v207 = vpack.c.b16 %v179, %v175
    %v208 = vpack.c.b16 %v184, %v180
    %v209 = vpack.c.b16 %v185, %v181
    %v210 = vpack.c.b16 %v186, %v182
    %v211 = vpack.c.b16 %v187, %v183
    %vm236 = vcmask 785408
    %v238 = vsel %vm236, %v91, 0
    %240 = vmatprep.subr.bf16.mxu0 %v189
    %241 = vmatpush1.bf16.msra.mxu0 %v188
    %242 = vmatprep.subr.bf16.mxu0 %v193
    %243 = vmatpush1.bf16.msra.mxu0 %v192
    %244 = vmatprep.subr.bf16.mxu0 %v197
    %245 = vmatpush1.bf16.msra.mxu0 %v196
    %246 = vmatprep.subr.bf16.mxu0 %v201
    %247 = vmatpush1.bf16.msra.mxu0 %v200
    %248 = vmatprep.subr.bf16.mxu0 %v205
    %249 = vmatpush1.bf16.msra.mxu0 %v204
    %250 = vmatprep.subr.bf16.mxu0 %v209
    %251 = vmatpush1.bf16.msra.mxu0 %v208
    %252 = vmatprep.subr.bf16.mxu0 0
    %253 = vmatpush1.bf16.msra.mxu0 0
    %254 = vmatprep.subr.bf16.mxu0 0
    %255 = vmatpush1.bf16.msra.mxu0 0
    %256 = vmatprep.subr.bf16.mxu0 0
    %257 = vmatpush1.bf16.msra.mxu0 0
    %258 = vmatprep.subr.bf16.mxu0 0
    %259 = vmatpush1.bf16.msra.mxu0 0
    %260 = vmatprep.subr.bf16.mxu0 0
    %261 = vmatpush1.bf16.msra.mxu0 0
    %262 = vmatprep.subr.bf16.mxu0 0
    %263 = vmatpush1.bf16.msra.mxu0 0
    %264 = vmatprep.subr.bf16.mxu0 0
    %265 = vmatpush1.bf16.msra.mxu0 0
    %266 = vmatprep.subr.bf16.mxu0 0
    %267 = vmatpush1.bf16.msra.mxu0 0
    %268 = vmatprep.subr.bf16.mxu0 0
    %269 = vmatpush1.bf16.msra.mxu0 0
    %270 = vmatprep.subr.bf16.mxu0 0
    %271 = vmatpush1.bf16.msra.mxu0 0
    %272 = vmatprep.mubr.bf16.mxu0 0
    %273 = vmatmul.mubr.bf16.gmra.mrb[0].mxu0 %v238
    %v274 = vpop.f32.mrb[0].mxu0
    %v275 = vadd.f32 0.0, %v274
    %v276 = vpop.f32.mrb[0].mxu0
    %v277 = vadd.f32 0.0, %v276
    %v278 = vpop.f32.mrb[0].mxu0
    %v279 = vadd.f32 0.0, %v278
    %v280 = vpop.f32.mrb[0].mxu0
    %v281 = vadd.f32 0.0, %v280
    %282 = vdwg.mxu0
    %283 = vmatprep.subr.bf16.mxu0 %v191
    %284 = vmatpush1.bf16.msra.mxu0 %v190
    %285 = vmatprep.subr.bf16.mxu0 %v195
    %286 = vmatpush1.bf16.msra.mxu0 %v194
    %287 = vmatprep.subr.bf16.mxu0 %v199
    %288 = vmatpush1.bf16.msra.mxu0 %v198
    %289 = vmatprep.subr.bf16.mxu0 %v203
    %290 = vmatpush1.bf16.msra.mxu0 %v202
    %291 = vmatprep.subr.bf16.mxu0 %v207
    %292 = vmatpush1.bf16.msra.mxu0 %v206
    %293 = vmatprep.subr.bf16.mxu0 %v211
    %294 = vmatpush1.bf16.msra.mxu0 %v210
    %295 = vmatprep.subr.bf16.mxu0 0
    %296 = vmatpush1.bf16.msra.mxu0 0
    %297 = vmatprep.subr.bf16.mxu0 0
    %298 = vmatpush1.bf16.msra.mxu0 0
    %299 = vmatprep.subr.bf16.mxu0 0
    %300 = vmatpush1.bf16.msra.mxu0 0
    %301 = vmatprep.subr.bf16.mxu0 0
    %302 = vmatpush1.bf16.msra.mxu0 0
    %303 = vmatprep.subr.bf16.mxu0 0
    %304 = vmatpush1.bf16.msra.mxu0 0
    %305 = vmatprep.subr.bf16.mxu0 0
    %306 = vmatpush1.bf16.msra.mxu0 0
    %307 = vmatprep.subr.bf16.mxu0 0
    %308 = vmatpush1.bf16.msra.mxu0 0
    %309 = vmatprep.subr.bf16.mxu0 0
    %310 = vmatpush1.bf16.msra.mxu0 0
    %311 = vmatprep.subr.bf16.mxu0 0
    %312 = vmatpush1.bf16.msra.mxu0 0
    %313 = vmatprep.subr.bf16.mxu0 0
    %314 = vmatpush1.bf16.msra.mxu0 0
    %315 = vmatprep.mubr.bf16.mxu0 0
    %316 = vmatmul.mubr.bf16.gmra.mrb[0].mxu0 %v238
    %v317 = vpop.f32.mrb[0].mxu0
    %v318 = vadd.f32 0.0, %v317
    %v319 = vpop.f32.mrb[0].mxu0
    %v320 = vadd.f32 0.0, %v319
    %v321 = vpop.f32.mrb[0].mxu0
    %v322 = vadd.f32 0.0, %v321
    %v323 = vpop.f32.mrb[0].mxu0
    %v324 = vadd.f32 0.0, %v323
    %325 = vdwg.mxu0
    %v326 = vpack.c.bf16 %v279, %v275
    %v327 = vpack.c.bf16 %v281, %v277
    %v328 = vpack.c.bf16 %v322, %v318
    %v329 = vpack.c.bf16 %v324, %v320
    %v330 = vld [vmem:[%s2] sm:$0xf]
    %v333 = vunpack.c.l.s4 1966171168
    %v334 = vunpack.c.0.s8 %v333
    %v335 = vlaneseq
    %v336 = vshrl.u32 %v335, 7
    %v337 = vsub.s32 %v334, %v336
    %v338 = vrot.slane %v330, %v337
    %v339 = vcombine.high %v338, %v338
    %v341 = vunpack.c.l.s4 1966171168
    %v342 = vunpack.c.0.s8 %v341
    %v343 = vlaneseq
    %v344 = vshrl.u32 %v343, 7
    %v345 = vsub.s32 %v342, %v344
    %v346 = vrot.slane %v338, %v345
    %v348 = vunpack.c.l.s4 1966171168
    %v349 = vunpack.c.0.s8 %v348
    %v350 = vlaneseq
    %v351 = vshrl.u32 %v350, 7
    %v352 = vsub.s32 %v349, %v351
    %v353 = vrot.slane %v339, %v352
    %v354 = vcombine.high %v346, %v346
    %v355 = vcombine.high %v353, %v353
    %v357 = vpack.i.b16 %v346, %v346
    %v359 = vlaneseq
    %v360 = vshrl.u32 %v359, 7
    %v361 = vsub.s32 0, %v360
    %v362 = vrot.slane %v357, %v361
    %v364 = vpack.i.b16 %v353, %v353
    %v366 = vlaneseq
    %v367 = vshrl.u32 %v366, 7
    %v368 = vsub.s32 0, %v367
    %v369 = vrot.slane %v364, %v368
    %v371 = vpack.i.b16 %v354, %v354
    %v373 = vlaneseq
    %v374 = vshrl.u32 %v373, 7
    %v375 = vsub.s32 0, %v374
    %v376 = vrot.slane %v371, %v375
    %v378 = vpack.i.b16 %v355, %v355
    %v380 = vlaneseq
    %v381 = vshrl.u32 %v380, 7
    %v382 = vsub.s32 0, %v381
    %v383 = vrot.slane %v378, %v382
    %v384 = vadd.bf16 %v326, %v362
    %v385 = vadd.bf16 %v327, %v369
    %v386 = vadd.bf16 %v328, %v376
    %v387 = vadd.bf16 %v329, %v383
    %v388 = vmul.bf16 %v384, 1009007652
    %v389 = vmul.bf16 %v385, 1009007652
    %v390 = vmul.bf16 %v386, 1009007652
    %v391 = vmul.bf16 %v387, 1009007652
    %v392 = vmax.bf16 %v384, %v388
    %v393 = vmax.bf16 %v385, %v389
    %v394 = vmax.bf16 %v386, %v390
    %v395 = vmax.bf16 %v387, %v391
    %v396 = vld [vmem:[#allocation4] sm:$0xff]
    %v397 = vld [vmem:[#allocation4 + $0x8] sm:$0xff]
    %v398 = vld [vmem:[#allocation4 + $0x10] sm:$0xff]
    %v399 = vld [vmem:[#allocation4 + $0x18] sm:$0xff]
    %v400 = vld [vmem:[#allocation4 + $0x20] sm:$0xff]
    %v401 = vld [vmem:[#allocation4 + $0x28] sm:$0xff]
    %v402 = vld [vmem:[#allocation4 + $0x30] sm:$0xff]
    %v403 = vld [vmem:[#allocation4 + $0x38] sm:$0xff]
    %v404 = vld [vmem:[#allocation4 + $0x40] sm:$0xff]
    %v405 = vld [vmem:[#allocation4 + $0x48] sm:$0xff]
    %v406 = vld [vmem:[#allocation4 + $0x50] sm:$0xff]
    %v407 = vld [vmem:[#allocation4 + $0x58] sm:$0xff]
    %v408 = vld [vmem:[#allocation4 + $0x60] sm:$0xff]
    %v409 = vld [vmem:[#allocation4 + $0x68] sm:$0xff]
    %v410 = vld [vmem:[#allocation4 + $0x70] sm:$0xff]
    %v411 = vld [vmem:[#allocation4 + $0x78] sm:$0xff]
    %v412 = vld [vmem:[#allocation4 + $0x80] sm:$0xff]
    %v413 = vld [vmem:[#allocation4 + $0x88] sm:$0xff]
    %v414 = vld [vmem:[#allocation4 + $0x90] sm:$0xff]
    %v415 = vld [vmem:[#allocation4 + $0x98] sm:$0xff]
    %v416 = vld [vmem:[#allocation4 + $0xa0] sm:$0xff]
    %v417 = vld [vmem:[#allocation4 + $0xa8] sm:$0xff]
    %v418 = vld [vmem:[#allocation4 + $0xb0] sm:$0xff]
    %v419 = vld [vmem:[#allocation4 + $0xb8] sm:$0xff]
    %v420 = vld [vmem:[#allocation4 + $0xc0] sm:$0xff]
    %v421 = vld [vmem:[#allocation4 + $0xc8] sm:$0xff]
    %v422 = vld [vmem:[#allocation4 + $0xd0] sm:$0xff]
    %v423 = vld [vmem:[#allocation4 + $0xd8] sm:$0xff]
    %v424 = vld [vmem:[#allocation4 + $0xe0] sm:$0xff]
    %v425 = vld [vmem:[#allocation4 + $0xe8] sm:$0xff]
    %v426 = vld [vmem:[#allocation4 + $0xf0] sm:$0xff]
    %v427 = vld [vmem:[#allocation4 + $0xf8] sm:$0xff]
    %v428 = vld [vmem:[#allocation4 + $0x100] sm:$0xff]
    %v429 = vld [vmem:[#allocation4 + $0x108] sm:$0xff]
    %v430 = vld [vmem:[#allocation4 + $0x110] sm:$0xff]
    %v431 = vld [vmem:[#allocation4 + $0x118] sm:$0xff]
    %v432 = vld [vmem:[#allocation4 + $0x120] sm:$0xff]
    %v433 = vld [vmem:[#allocation4 + $0x128] sm:$0xff]
    %v434 = vld [vmem:[#allocation4 + $0x130] sm:$0xff]
    %v435 = vld [vmem:[#allocation4 + $0x138] sm:$0xff]
    %v436 = vld [vmem:[#allocation4 + $0x140] sm:$0xff]
    %v437 = vld [vmem:[#allocation4 + $0x148] sm:$0xff]
    %v438 = vld [vmem:[#allocation4 + $0x150] sm:$0xff]
    %v439 = vld [vmem:[#allocation4 + $0x158] sm:$0xff]
    %v440 = vld [vmem:[#allocation4 + $0x160] sm:$0xff]
    %v441 = vld [vmem:[#allocation4 + $0x168] sm:$0xff]
    %v442 = vld [vmem:[#allocation4 + $0x170] sm:$0xff]
    %v443 = vld [vmem:[#allocation4 + $0x178] sm:$0xff]
    %v444 = vld [vmem:[#allocation4 + $0x180] sm:$0xff]
    %v445 = vld [vmem:[#allocation4 + $0x188] sm:$0xff]
    %v446 = vld [vmem:[#allocation4 + $0x190] sm:$0xff]
    %v447 = vld [vmem:[#allocation4 + $0x198] sm:$0xff]
    %v448 = vld [vmem:[#allocation4 + $0x1a0] sm:$0xff]
    %v449 = vld [vmem:[#allocation4 + $0x1a8] sm:$0xff]
    %v450 = vld [vmem:[#allocation4 + $0x1b0] sm:$0xff]
    %v451 = vld [vmem:[#allocation4 + $0x1b8] sm:$0xff]
    %v452 = vld [vmem:[#allocation4 + $0x1c0] sm:$0xff]
    %v453 = vld [vmem:[#allocation4 + $0x1c8] sm:$0xff]
    %v454 = vld [vmem:[#allocation4 + $0x1d0] sm:$0xff]
    %v455 = vld [vmem:[#allocation4 + $0x1d8] sm:$0xff]
    %v456 = vld [vmem:[#allocation4 + $0x1e0] sm:$0xff]
    %v457 = vld [vmem:[#allocation4 + $0x1e8] sm:$0xff]
    %v458 = vld [vmem:[#allocation4 + $0x1f0] sm:$0xff]
    %v459 = vld [vmem:[#allocation4 + $0x1f8] sm:$0xff]
    %v460 = vld [vmem:[#allocation4 + $0x200] sm:$0xff]
    %v461 = vld [vmem:[#allocation4 + $0x208] sm:$0xff]
    %v462 = vld [vmem:[#allocation4 + $0x210] sm:$0xff]
    %v463 = vld [vmem:[#allocation4 + $0x218] sm:$0xff]
    %v464 = vld [vmem:[#allocation4 + $0x220] sm:$0xff]
    %v465 = vld [vmem:[#allocation4 + $0x228] sm:$0xff]
    %v466 = vld [vmem:[#allocation4 + $0x230] sm:$0xff]
    %v467 = vld [vmem:[#allocation4 + $0x238] sm:$0xff]
    %v468 = vld [vmem:[#allocation4 + $0x240] sm:$0xff]
    %v469 = vld [vmem:[#allocation4 + $0x248] sm:$0xff]
    %v470 = vld [vmem:[#allocation4 + $0x250] sm:$0xff]
    %v471 = vld [vmem:[#allocation4 + $0x258] sm:$0xff]
    %v472 = vld [vmem:[#allocation4 + $0x260] sm:$0xff]
    %v473 = vld [vmem:[#allocation4 + $0x268] sm:$0xff]
    %v474 = vld [vmem:[#allocation4 + $0x270] sm:$0xff]
    %v475 = vld [vmem:[#allocation4 + $0x278] sm:$0xff]
    %v476 = vld [vmem:[#allocation4 + $0x280] sm:$0xff]
    %v477 = vld [vmem:[#allocation4 + $0x288] sm:$0xff]
    %v478 = vld [vmem:[#allocation4 + $0x290] sm:$0xff]
    %v479 = vld [vmem:[#allocation4 + $0x298] sm:$0xff]
    %v480 = vld [vmem:[#allocation4 + $0x2a0] sm:$0xff]
    %v481 = vld [vmem:[#allocation4 + $0x2a8] sm:$0xff]
    %v482 = vld [vmem:[#allocation4 + $0x2b0] sm:$0xff]
    %v483 = vld [vmem:[#allocation4 + $0x2b8] sm:$0xff]
    %v484 = vld [vmem:[#allocation4 + $0x2c0] sm:$0xff]
    %v485 = vld [vmem:[#allocation4 + $0x2c8] sm:$0xff]
    %v486 = vld [vmem:[#allocation4 + $0x2d0] sm:$0xff]
    %v487 = vld [vmem:[#allocation4 + $0x2d8] sm:$0xff]
    %v488 = vld [vmem:[#allocation4 + $0x2e0] sm:$0xff]
    %v489 = vld [vmem:[#allocation4 + $0x2e8] sm:$0xff]
    %v490 = vld [vmem:[#allocation4 + $0x2f0] sm:$0xff]
    %v491 = vld [vmem:[#allocation4 + $0x2f8] sm:$0xff]
    %v492 = vld [vmem:[#allocation4 + $0x300] sm:$0xff]
    %v493 = vld [vmem:[#allocation4 + $0x308] sm:$0xff]
    %v494 = vld [vmem:[#allocation4 + $0x310] sm:$0xff]
    %v495 = vld [vmem:[#allocation4 + $0x318] sm:$0xff]
    %v496 = vld [vmem:[#allocation4 + $0x320] sm:$0xff]
    %v497 = vld [vmem:[#allocation4 + $0x328] sm:$0xff]
    %v498 = vld [vmem:[#allocation4 + $0x330] sm:$0xff]
    %v499 = vld [vmem:[#allocation4 + $0x338] sm:$0xff]
    %v500 = vld [vmem:[#allocation4 + $0x340] sm:$0xff]
    %v501 = vld [vmem:[#allocation4 + $0x348] sm:$0xff]
    %v502 = vld [vmem:[#allocation4 + $0x350] sm:$0xff]
    %v503 = vld [vmem:[#allocation4 + $0x358] sm:$0xff]
    %v504 = vld [vmem:[#allocation4 + $0x360] sm:$0xff]
    %v505 = vld [vmem:[#allocation4 + $0x368] sm:$0xff]
    %v506 = vld [vmem:[#allocation4 + $0x370] sm:$0xff]
    %v507 = vld [vmem:[#allocation4 + $0x378] sm:$0xff]
    %v508 = vld [vmem:[#allocation4 + $0x380] sm:$0xff]
    %v509 = vld [vmem:[#allocation4 + $0x388] sm:$0xff]
    %v510 = vld [vmem:[#allocation4 + $0x390] sm:$0xff]
    %v511 = vld [vmem:[#allocation4 + $0x398] sm:$0xff]
    %v512 = vld [vmem:[#allocation4 + $0x3a0] sm:$0xff]
    %v513 = vld [vmem:[#allocation4 + $0x3a8] sm:$0xff]
    %v514 = vld [vmem:[#allocation4 + $0x3b0] sm:$0xff]
    %v515 = vld [vmem:[#allocation4 + $0x3b8] sm:$0xff]
    %v516 = vld [vmem:[#allocation4 + $0x3c0] sm:$0xff]
    %v517 = vld [vmem:[#allocation4 + $0x3c8] sm:$0xff]
    %v518 = vld [vmem:[#allocation4 + $0x3d0] sm:$0xff]
    %v519 = vld [vmem:[#allocation4 + $0x3d8] sm:$0xff]
    %v520 = vld [vmem:[#allocation4 + $0x3e0] sm:$0xff]
    %v521 = vld [vmem:[#allocation4 + $0x3e8] sm:$0xff]
    %v522 = vld [vmem:[#allocation4 + $0x3f0] sm:$0xff]
    %v523 = vld [vmem:[#allocation4 + $0x3f8] sm:$0xff]
    %v652 = vunpack.c.l.b16 %v396
    %v653 = vunpack.c.h.b16 %v396
    %v654 = vunpack.c.l.b16 %v397
    %v655 = vunpack.c.h.b16 %v397
    %v656 = vunpack.c.l.b16 %v398
    %v657 = vunpack.c.h.b16 %v398
    %v658 = vunpack.c.l.b16 %v399
    %v659 = vunpack.c.h.b16 %v399
    %v660 = vunpack.c.l.b16 %v400
    %v661 = vunpack.c.h.b16 %v400
    %v662 = vunpack.c.l.b16 %v401
    %v663 = vunpack.c.h.b16 %v401
    %v664 = vunpack.c.l.b16 %v402
    %v665 = vunpack.c.h.b16 %v402
    %v666 = vunpack.c.l.b16 %v403
    %v667 = vunpack.c.h.b16 %v403
    %v668 = vunpack.c.l.b16 %v404
    %v669 = vunpack.c.h.b16 %v404
    %v670 = vunpack.c.l.b16 %v405
    %v671 = vunpack.c.h.b16 %v405
    %v672 = vunpack.c.l.b16 %v406
    %v673 = vunpack.c.h.b16 %v406
    %v674 = vunpack.c.l.b16 %v407
    %v675 = vunpack.c.h.b16 %v407
    %v676 = vunpack.c.l.b16 %v408
    %v677 = vunpack.c.h.b16 %v408
    %v678 = vunpack.c.l.b16 %v409
    %v679 = vunpack.c.h.b16 %v409
    %v680 = vunpack.c.l.b16 %v410
    %v681 = vunpack.c.h.b16 %v410
    %v682 = vunpack.c.l.b16 %v411
    %v683 = vunpack.c.h.b16 %v411
    %v684 = vunpack.c.l.b16 %v412
    %v685 = vunpack.c.h.b16 %v412
    %v686 = vunpack.c.l.b16 %v413
    %v687 = vunpack.c.h.b16 %v413
    %v688 = vunpack.c.l.b16 %v414
    %v689 = vunpack.c.h.b16 %v414
    %v690 = vunpack.c.l.b16 %v415
    %v691 = vunpack.c.h.b16 %v415
    %v692 = vunpack.c.l.b16 %v416
    %v693 = vunpack.c.h.b16 %v416
    %v694 = vunpack.c.l.b16 %v417
    %v695 = vunpack.c.h.b16 %v417
    %v696 = vunpack.c.l.b16 %v418
    %v697 = vunpack.c.h.b16 %v418
    %v698 = vunpack.c.l.b16 %v419
    %v699 = vunpack.c.h.b16 %v419
    %v700 = vunpack.c.l.b16 %v420
    %v701 = vunpack.c.h.b16 %v420
    %v702 = vunpack.c.l.b16 %v421
    %v703 = vunpack.c.h.b16 %v421
    %v704 = vunpack.c.l.b16 %v422
    %v705 = vunpack.c.h.b16 %v422
    %v706 = vunpack.c.l.b16 %v423
    %v707 = vunpack.c.h.b16 %v423
    %v708 = vunpack.c.l.b16 %v424
    %v709 = vunpack.c.h.b16 %v424
    %v710 = vunpack.c.l.b16 %v425
    %v711 = vunpack.c.h.b16 %v425
    %v712 = vunpack.c.l.b16 %v426
    %v713 = vunpack.c.h.b16 %v426
    %v714 = vunpack.c.l.b16 %v427
    %v715 = vunpack.c.h.b16 %v427
    %v716 = vunpack.c.l.b16 %v428
    %v717 = vunpack.c.h.b16 %v428
    %v718 = vunpack.c.l.b16 %v429
    %v719 = vunpack.c.h.b16 %v429
    %v720 = vunpack.c.l.b16 %v430
    %v721 = vunpack.c.h.b16 %v430
    %v722 = vunpack.c.l.b16 %v431
    %v723 = vunpack.c.h.b16 %v431
    %v724 = vunpack.c.l.b16 %v432
    %v725 = vunpack.c.h.b16 %v432
    %v726 = vunpack.c.l.b16 %v433
    %v727 = vunpack.c.h.b16 %v433
    %v728 = vunpack.c.l.b16 %v434
    %v729 = vunpack.c.h.b16 %v434
    %v730 = vunpack.c.l.b16 %v435
    %v731 = vunpack.c.h.b16 %v435
    %v732 = vunpack.c.l.b16 %v436
    %v733 = vunpack.c.h.b16 %v436
    %v734 = vunpack.c.l.b16 %v437
    %v735 = vunpack.c.h.b16 %v437
    %v736 = vunpack.c.l.b16 %v438
    %v737 = vunpack.c.h.b16 %v438
    %v738 = vunpack.c.l.b16 %v439
    %v739 = vunpack.c.h.b16 %v439
    %v740 = vunpack.c.l.b16 %v440
    %v741 = vunpack.c.h.b16 %v440
    %v742 = vunpack.c.l.b16 %v441
    %v743 = vunpack.c.h.b16 %v441
    %v744 = vunpack.c.l.b16 %v442
    %v745 = vunpack.c.h.b16 %v442
    %v746 = vunpack.c.l.b16 %v443
    %v747 = vunpack.c.h.b16 %v443
    %v748 = vunpack.c.l.b16 %v444
    %v749 = vunpack.c.h.b16 %v444
    %v750 = vunpack.c.l.b16 %v445
    %v751 = vunpack.c.h.b16 %v445
    %v752 = vunpack.c.l.b16 %v446
    %v753 = vunpack.c.h.b16 %v446
    %v754 = vunpack.c.l.b16 %v447
    %v755 = vunpack.c.h.b16 %v447
    %v756 = vunpack.c.l.b16 %v448
    %v757 = vunpack.c.h.b16 %v448
    %v758 = vunpack.c.l.b16 %v449
    %v759 = vunpack.c.h.b16 %v449
    %v760 = vunpack.c.l.b16 %v450
    %v761 = vunpack.c.h.b16 %v450
    %v762 = vunpack.c.l.b16 %v451
    %v763 = vunpack.c.h.b16 %v451
    %v764 = vunpack.c.l.b16 %v452
    %v765 = vunpack.c.h.b16 %v452
    %v766 = vunpack.c.l.b16 %v453
    %v767 = vunpack.c.h.b16 %v453
    %v768 = vunpack.c.l.b16 %v454
    %v769 = vunpack.c.h.b16 %v454
    %v770 = vunpack.c.l.b16 %v455
    %v771 = vunpack.c.h.b16 %v455
    %v772 = vunpack.c.l.b16 %v456
    %v773 = vunpack.c.h.b16 %v456
    %v774 = vunpack.c.l.b16 %v457
    %v775 = vunpack.c.h.b16 %v457
    %v776 = vunpack.c.l.b16 %v458
    %v777 = vunpack.c.h.b16 %v458
    %v778 = vunpack.c.l.b16 %v459
    %v779 = vunpack.c.h.b16 %v459
    %v780 = vunpack.c.l.b16 %v460
    %v781 = vunpack.c.h.b16 %v460
    %v782 = vunpack.c.l.b16 %v461
    %v783 = vunpack.c.h.b16 %v461
    %v784 = vunpack.c.l.b16 %v462
    %v785 = vunpack.c.h.b16 %v462
    %v786 = vunpack.c.l.b16 %v463
    %v787 = vunpack.c.h.b16 %v463
    %v788 = vunpack.c.l.b16 %v464
    %v789 = vunpack.c.h.b16 %v464
    %v790 = vunpack.c.l.b16 %v465
    %v791 = vunpack.c.h.b16 %v465
    %v792 = vunpack.c.l.b16 %v466
    %v793 = vunpack.c.h.b16 %v466
    %v794 = vunpack.c.l.b16 %v467
    %v795 = vunpack.c.h.b16 %v467
    %v796 = vunpack.c.l.b16 %v468
    %v797 = vunpack.c.h.b16 %v468
    %v798 = vunpack.c.l.b16 %v469
    %v799 = vunpack.c.h.b16 %v469
    %v800 = vunpack.c.l.b16 %v470
    %v801 = vunpack.c.h.b16 %v470
    %v802 = vunpack.c.l.b16 %v471
    %v803 = vunpack.c.h.b16 %v471
    %v804 = vunpack.c.l.b16 %v472
    %v805 = vunpack.c.h.b16 %v472
    %v806 = vunpack.c.l.b16 %v473
    %v807 = vunpack.c.h.b16 %v473
    %v808 = vunpack.c.l.b16 %v474
    %v809 = vunpack.c.h.b16 %v474
    %v810 = vunpack.c.l.b16 %v475
    %v811 = vunpack.c.h.b16 %v475
    %v812 = vunpack.c.l.b16 %v476
    %v813 = vunpack.c.h.b16 %v476
    %v814 = vunpack.c.l.b16 %v477
    %v815 = vunpack.c.h.b16 %v477
    %v816 = vunpack.c.l.b16 %v478
    %v817 = vunpack.c.h.b16 %v478
    %v818 = vunpack.c.l.b16 %v479
    %v819 = vunpack.c.h.b16 %v479
    %v820 = vunpack.c.l.b16 %v480
    %v821 = vunpack.c.h.b16 %v480
    %v822 = vunpack.c.l.b16 %v481
    %v823 = vunpack.c.h.b16 %v481
    %v824 = vunpack.c.l.b16 %v482
    %v825 = vunpack.c.h.b16 %v482
    %v826 = vunpack.c.l.b16 %v483
    %v827 = vunpack.c.h.b16 %v483
    %v828 = vunpack.c.l.b16 %v484
    %v829 = vunpack.c.h.b16 %v484
    %v830 = vunpack.c.l.b16 %v485
    %v831 = vunpack.c.h.b16 %v485
    %v832 = vunpack.c.l.b16 %v486
    %v833 = vunpack.c.h.b16 %v486
    %v834 = vunpack.c.l.b16 %v487
    %v835 = vunpack.c.h.b16 %v487
    %v836 = vunpack.c.l.b16 %v488
    %v837 = vunpack.c.h.b16 %v488
    %v838 = vunpack.c.l.b16 %v489
    %v839 = vunpack.c.h.b16 %v489
    %v840 = vunpack.c.l.b16 %v490
    %v841 = vunpack.c.h.b16 %v490
    %v842 = vunpack.c.l.b16 %v491
    %v843 = vunpack.c.h.b16 %v491
    %v844 = vunpack.c.l.b16 %v492
    %v845 = vunpack.c.h.b16 %v492
    %v846 = vunpack.c.l.b16 %v493
    %v847 = vunpack.c.h.b16 %v493
    %v848 = vunpack.c.l.b16 %v494
    %v849 = vunpack.c.h.b16 %v494
    %v850 = vunpack.c.l.b16 %v495
    %v851 = vunpack.c.h.b16 %v495
    %v852 = vunpack.c.l.b16 %v496
    %v853 = vunpack.c.h.b16 %v496
    %v854 = vunpack.c.l.b16 %v497
    %v855 = vunpack.c.h.b16 %v497
    %v856 = vunpack.c.l.b16 %v498
    %v857 = vunpack.c.h.b16 %v498
    %v858 = vunpack.c.l.b16 %v499
    %v859 = vunpack.c.h.b16 %v499
    %v860 = vunpack.c.l.b16 %v500
    %v861 = vunpack.c.h.b16 %v500
    %v862 = vunpack.c.l.b16 %v501
    %v863 = vunpack.c.h.b16 %v501
    %v864 = vunpack.c.l.b16 %v502
    %v865 = vunpack.c.h.b16 %v502
    %v866 = vunpack.c.l.b16 %v503
    %v867 = vunpack.c.h.b16 %v503
    %v868 = vunpack.c.l.b16 %v504
    %v869 = vunpack.c.h.b16 %v504
    %v870 = vunpack.c.l.b16 %v505
    %v871 = vunpack.c.h.b16 %v505
    %v872 = vunpack.c.l.b16 %v506
    %v873 = vunpack.c.h.b16 %v506
    %v874 = vunpack.c.l.b16 %v507
    %v875 = vunpack.c.h.b16 %v507
    %v876 = vunpack.c.l.b16 %v508
    %v877 = vunpack.c.h.b16 %v508
    %v878 = vunpack.c.l.b16 %v509
    %v879 = vunpack.c.h.b16 %v509
    %v880 = vunpack.c.l.b16 %v510
    %v881 = vunpack.c.h.b16 %v510
    %v882 = vunpack.c.l.b16 %v511
    %v883 = vunpack.c.h.b16 %v511
    %v884 = vunpack.c.l.b16 %v512
    %v885 = vunpack.c.h.b16 %v512
    %v886 = vunpack.c.l.b16 %v513
    %v887 = vunpack.c.h.b16 %v513
    %v888 = vunpack.c.l.b16 %v514
    %v889 = vunpack.c.h.b16 %v514
    %v890 = vunpack.c.l.b16 %v515
    %v891 = vunpack.c.h.b16 %v515
    %v892 = vunpack.c.l.b16 %v516
    %v893 = vunpack.c.h.b16 %v516
    %v894 = vunpack.c.l.b16 %v517
    %v895 = vunpack.c.h.b16 %v517
    %v896 = vunpack.c.l.b16 %v518
    %v897 = vunpack.c.h.b16 %v518
    %v898 = vunpack.c.l.b16 %v519
    %v899 = vunpack.c.h.b16 %v519
    %v900 = vunpack.c.l.b16 %v520
    %v901 = vunpack.c.h.b16 %v520
    %v902 = vunpack.c.l.b16 %v521
    %v903 = vunpack.c.h.b16 %v521
    %v904 = vunpack.c.l.b16 %v522
    %v905 = vunpack.c.h.b16 %v522
    %v906 = vunpack.c.l.b16 %v523
    %v907 = vunpack.c.h.b16 %v523
    %v908 = vpack.c.b16 %v656, %v652
    %v909 = vpack.c.b16 %v657, %v653
    %v910 = vpack.c.b16 %v658, %v654
    %v911 = vpack.c.b16 %v659, %v655
    %v912 = vpack.c.b16 %v664, %v660
    %v913 = vpack.c.b16 %v665, %v661
    %v914 = vpack.c.b16 %v666, %v662
    %v915 = vpack.c.b16 %v667, %v663
    %v916 = vpack.c.b16 %v672, %v668
    %v917 = vpack.c.b16 %v673, %v669
    %v918 = vpack.c.b16 %v674, %v670
    %v919 = vpack.c.b16 %v675, %v671
    %v920 = vpack.c.b16 %v680, %v676
    %v921 = vpack.c.b16 %v681, %v677
    %v922 = vpack.c.b16 %v682, %v678
    %v923 = vpack.c.b16 %v683, %v679
    %v924 = vpack.c.b16 %v688, %v684
    %v925 = vpack.c.b16 %v689, %v685
    %v926 = vpack.c.b16 %v690, %v686
    %v927 = vpack.c.b16 %v691, %v687
    %v928 = vpack.c.b16 %v696, %v692
    %v929 = vpack.c.b16 %v697, %v693
    %v930 = vpack.c.b16 %v698, %v694
    %v931 = vpack.c.b16 %v699, %v695
    %v932 = vpack.c.b16 %v704, %v700
    %v933 = vpack.c.b16 %v705, %v701
    %v934 = vpack.c.b16 %v706, %v702
    %v935 = vpack.c.b16 %v707, %v703
    %v936 = vpack.c.b16 %v712, %v708
    %v937 = vpack.c.b16 %v713, %v709
    %v938 = vpack.c.b16 %v714, %v710
    %v939 = vpack.c.b16 %v715, %v711
    %v940 = vpack.c.b16 %v720, %v716
    %v941 = vpack.c.b16 %v721, %v717
    %v942 = vpack.c.b16 %v722, %v718
    %v943 = vpack.c.b16 %v723, %v719
    %v944 = vpack.c.b16 %v728, %v724
    %v945 = vpack.c.b16 %v729, %v725
    %v946 = vpack.c.b16 %v730, %v726
    %v947 = vpack.c.b16 %v731, %v727
    %v948 = vpack.c.b16 %v736, %v732
    %v949 = vpack.c.b16 %v737, %v733
    %v950 = vpack.c.b16 %v738, %v734
    %v951 = vpack.c.b16 %v739, %v735
    %v952 = vpack.c.b16 %v744, %v740
    %v953 = vpack.c.b16 %v745, %v741
    %v954 = vpack.c.b16 %v746, %v742
    %v955 = vpack.c.b16 %v747, %v743
    %v956 = vpack.c.b16 %v752, %v748
    %v957 = vpack.c.b16 %v753, %v749
    %v958 = vpack.c.b16 %v754, %v750
    %v959 = vpack.c.b16 %v755, %v751
    %v960 = vpack.c.b16 %v760, %v756
    %v961 = vpack.c.b16 %v761, %v757
    %v962 = vpack.c.b16 %v762, %v758
    %v963 = vpack.c.b16 %v763, %v759
    %v964 = vpack.c.b16 %v768, %v764
    %v965 = vpack.c.b16 %v769, %v765
    %v966 = vpack.c.b16 %v770, %v766
    %v967 = vpack.c.b16 %v771, %v767
    %v968 = vpack.c.b16 %v776, %v772
    %v969 = vpack.c.b16 %v777, %v773
    %v970 = vpack.c.b16 %v778, %v774
    %v971 = vpack.c.b16 %v779, %v775
    %v972 = vpack.c.b16 %v784, %v780
    %v973 = vpack.c.b16 %v785, %v781
    %v974 = vpack.c.b16 %v786, %v782
    %v975 = vpack.c.b16 %v787, %v783
    %v976 = vpack.c.b16 %v792, %v788
    %v977 = vpack.c.b16 %v793, %v789
    %v978 = vpack.c.b16 %v794, %v790
    %v979 = vpack.c.b16 %v795, %v791
    %v980 = vpack.c.b16 %v800, %v796
    %v981 = vpack.c.b16 %v801, %v797
    %v982 = vpack.c.b16 %v802, %v798
    %v983 = vpack.c.b16 %v803, %v799
    %v984 = vpack.c.b16 %v808, %v804
    %v985 = vpack.c.b16 %v809, %v805
    %v986 = vpack.c.b16 %v810, %v806
    %v987 = vpack.c.b16 %v811, %v807
    %v988 = vpack.c.b16 %v816, %v812
    %v989 = vpack.c.b16 %v817, %v813
    %v990 = vpack.c.b16 %v818, %v814
    %v991 = vpack.c.b16 %v819, %v815
    %v992 = vpack.c.b16 %v824, %v820
    %v993 = vpack.c.b16 %v825, %v821
    %v994 = vpack.c.b16 %v826, %v822
    %v995 = vpack.c.b16 %v827, %v823
    %v996 = vpack.c.b16 %v832, %v828
    %v997 = vpack.c.b16 %v833, %v829
    %v998 = vpack.c.b16 %v834, %v830
    %v999 = vpack.c.b16 %v835, %v831
    %v1000 = vpack.c.b16 %v840, %v836
    %v1001 = vpack.c.b16 %v841, %v837
    %v1002 = vpack.c.b16 %v842, %v838
    %v1003 = vpack.c.b16 %v843, %v839
    %v1004 = vpack.c.b16 %v848, %v844
    %v1005 = vpack.c.b16 %v849, %v845
    %v1006 = vpack.c.b16 %v850, %v846
    %v1007 = vpack.c.b16 %v851, %v847
    %v1008 = vpack.c.b16 %v856, %v852
    %v1009 = vpack.c.b16 %v857, %v853
    %v1010 = vpack.c.b16 %v858, %v854
    %v1011 = vpack.c.b16 %v859, %v855
    %v1012 = vpack.c.b16 %v864, %v860
    %v1013 = vpack.c.b16 %v865, %v861
    %v1014 = vpack.c.b16 %v866, %v862
    %v1015 = vpack.c.b16 %v867, %v863
    %v1016 = vpack.c.b16 %v872, %v868
    %v1017 = vpack.c.b16 %v873, %v869
    %v1018 = vpack.c.b16 %v874, %v870
    %v1019 = vpack.c.b16 %v875, %v871
    %v1020 = vpack.c.b16 %v880, %v876
    %v1021 = vpack.c.b16 %v881, %v877
    %v1022 = vpack.c.b16 %v882, %v878
    %v1023 = vpack.c.b16 %v883, %v879
    %v1024 = vpack.c.b16 %v888, %v884
    %v1025 = vpack.c.b16 %v889, %v885
    %v1026 = vpack.c.b16 %v890, %v886
    %v1027 = vpack.c.b16 %v891, %v887
    %v1028 = vpack.c.b16 %v896, %v892
    %v1029 = vpack.c.b16 %v897, %v893
    %v1030 = vpack.c.b16 %v898, %v894
    %v1031 = vpack.c.b16 %v899, %v895
    %v1032 = vpack.c.b16 %v904, %v900
    %v1033 = vpack.c.b16 %v905, %v901
    %v1034 = vpack.c.b16 %v906, %v902
    %v1035 = vpack.c.b16 %v907, %v903
    %1164 = vmatprep.subr.bf16.mxu0 %v909
    %1165 = vmatpush1.bf16.msra.mxu0 %v908
    %1166 = vmatprep.subr.bf16.mxu0 %v913
    %1167 = vmatpush1.bf16.msra.mxu0 %v912
    %1168 = vmatprep.subr.bf16.mxu0 %v917
    %1169 = vmatpush1.bf16.msra.mxu0 %v916
    %1170 = vmatprep.subr.bf16.mxu0 %v921
    %1171 = vmatpush1.bf16.msra.mxu0 %v920
    %1172 = vmatprep.subr.bf16.mxu0 %v925
    %1173 = vmatpush1.bf16.msra.mxu0 %v924
    %1174 = vmatprep.subr.bf16.mxu0 %v929
    %1175 = vmatpush1.bf16.msra.mxu0 %v928
    %1176 = vmatprep.subr.bf16.mxu0 %v933
    %1177 = vmatpush1.bf16.msra.mxu0 %v932
    %1178 = vmatprep.subr.bf16.mxu0 %v937
    %1179 = vmatpush1.bf16.msra.mxu0 %v936
    %1180 = vmatprep.subr.bf16.mxu0 %v941
    %1181 = vmatpush1.bf16.msra.mxu0 %v940
    %1182 = vmatprep.subr.bf16.mxu0 %v945
    %1183 = vmatpush1.bf16.msra.mxu0 %v944
    %1184 = vmatprep.subr.bf16.mxu0 %v949
    %1185 = vmatpush1.bf16.msra.mxu0 %v948
    %1186 = vmatprep.subr.bf16.mxu0 %v953
    %1187 = vmatpush1.bf16.msra.mxu0 %v952
    %1188 = vmatprep.subr.bf16.mxu0 %v957
    %1189 = vmatpush1.bf16.msra.mxu0 %v956
    %1190 = vmatprep.subr.bf16.mxu0 %v961
    %1191 = vmatpush1.bf16.msra.mxu0 %v960
    %1192 = vmatprep.subr.bf16.mxu0 %v965
    %1193 = vmatpush1.bf16.msra.mxu0 %v964
    %1194 = vmatprep.subr.bf16.mxu0 %v969
    %1195 = vmatpush1.bf16.msra.mxu0 %v968
    %1196 = vmatprep.mubr.bf16.mxu0 %v393
    %1197 = vmatmul.mubr.bf16.gmra.mrb[0].mxu0 %v392
    %v1198 = vpop.f32.mrb[0].mxu0
    %v1199 = vadd.f32 0.0, %v1198
    %v1200 = vpop.f32.mrb[0].mxu0
    %v1201 = vadd.f32 0.0, %v1200
    %v1202 = vpop.f32.mrb[0].mxu0
    %v1203 = vadd.f32 0.0, %v1202
    %v1204 = vpop.f32.mrb[0].mxu0
    %v1205 = vadd.f32 0.0, %v1204
    %1206 = vdwg.mxu0
    %1207 = vmatprep.subr.bf16.mxu0 %v973
    %1208 = vmatpush1.bf16.msra.mxu0 %v972
    %1209 = vmatprep.subr.bf16.mxu0 %v977
    %1210 = vmatpush1.bf16.msra.mxu0 %v976
    %1211 = vmatprep.subr.bf16.mxu0 %v981
    %1212 = vmatpush1.bf16.msra.mxu0 %v980
    %1213 = vmatprep.subr.bf16.mxu0 %v985
    %1214 = vmatpush1.bf16.msra.mxu0 %v984
    %1215 = vmatprep.subr.bf16.mxu0 %v989
    %1216 = vmatpush1.bf16.msra.mxu0 %v988
    %1217 = vmatprep.subr.bf16.mxu0 %v993
    %1218 = vmatpush1.bf16.msra.mxu0 %v992
    %1219 = vmatprep.subr.bf16.mxu0 %v997
    %1220 = vmatpush1.bf16.msra.mxu0 %v996
    %1221 = vmatprep.subr.bf16.mxu0 %v1001
    %1222 = vmatpush1.bf16.msra.mxu0 %v1000
    %1223 = vmatprep.subr.bf16.mxu0 %v1005
    %1224 = vmatpush1.bf16.msra.mxu0 %v1004
    %1225 = vmatprep.subr.bf16.mxu0 %v1009
    %1226 = vmatpush1.bf16.msra.mxu0 %v1008
    %1227 = vmatprep.subr.bf16.mxu0 %v1013
    %1228 = vmatpush1.bf16.msra.mxu0 %v1012
    %1229 = vmatprep.subr.bf16.mxu0 %v1017
    %1230 = vmatpush1.bf16.msra.mxu0 %v1016
    %1231 = vmatprep.subr.bf16.mxu0 %v1021
    %1232 = vmatpush1.bf16.msra.mxu0 %v1020
    %1233 = vmatprep.subr.bf16.mxu0 %v1025
    %1234 = vmatpush1.bf16.msra.mxu0 %v1024
    %1235 = vmatprep.subr.bf16.mxu0 %v1029
    %1236 = vmatpush1.bf16.msra.mxu0 %v1028
    %1237 = vmatprep.subr.bf16.mxu0 %v1033
    %1238 = vmatpush1.bf16.msra.mxu0 %v1032
    %1239 = vmatprep.mubr.bf16.mxu0 %v395
    %1240 = vmatmul.mubr.bf16.gmra.mrb[0].mxu0 %v394
    %v1241 = vpop.f32.mrb[0].mxu0
    %v1242 = vadd.f32 %v1199, %v1241
    %v1243 = vpop.f32.mrb[0].mxu0
    %v1244 = vadd.f32 %v1201, %v1243
    %v1245 = vpop.f32.mrb[0].mxu0
    %v1246 = vadd.f32 %v1203, %v1245
    %v1247 = vpop.f32.mrb[0].mxu0
    %v1248 = vadd.f32 %v1205, %v1247
    %1249 = vdwg.mxu0
    %1250 = vmatprep.subr.bf16.mxu0 %v911
    %1251 = vmatpush1.bf16.msra.mxu0 %v910
    %1252 = vmatprep.subr.bf16.mxu0 %v915
    %1253 = vmatpush1.bf16.msra.mxu0 %v914
    %1254 = vmatprep.subr.bf16.mxu0 %v919
    %1255 = vmatpush1.bf16.msra.mxu0 %v918
    %1256 = vmatprep.subr.bf16.mxu0 %v923
    %1257 = vmatpush1.bf16.msra.mxu0 %v922
    %1258 = vmatprep.subr.bf16.mxu0 %v927
    %1259 = vmatpush1.bf16.msra.mxu0 %v926
    %1260 = vmatprep.subr.bf16.mxu0 %v931
    %1261 = vmatpush1.bf16.msra.mxu0 %v930
    %1262 = vmatprep.subr.bf16.mxu0 %v935
    %1263 = vmatpush1.bf16.msra.mxu0 %v934
    %1264 = vmatprep.subr.bf16.mxu0 %v939
    %1265 = vmatpush1.bf16.msra.mxu0 %v938
    %1266 = vmatprep.subr.bf16.mxu0 %v943
    %1267 = vmatpush1.bf16.msra.mxu0 %v942
    %1268 = vmatprep.subr.bf16.mxu0 %v947
    %1269 = vmatpush1.bf16.msra.mxu0 %v946
    %1270 = vmatprep.subr.bf16.mxu0 %v951
    %1271 = vmatpush1.bf16.msra.mxu0 %v950
    %1272 = vmatprep.subr.bf16.mxu0 %v955
    %1273 = vmatpush1.bf16.msra.mxu0 %v954
    %1274 = vmatprep.subr.bf16.mxu0 %v959
    %1275 = vmatpush1.bf16.msra.mxu0 %v958
    %1276 = vmatprep.subr.bf16.mxu0 %v963
    %1277 = vmatpush1.bf16.msra.mxu0 %v962
    %1278 = vmatprep.subr.bf16.mxu0 %v967
    %1279 = vmatpush1.bf16.msra.mxu0 %v966
    %1280 = vmatprep.subr.bf16.mxu0 %v971
    %1281 = vmatpush1.bf16.msra.mxu0 %v970
    %1282 = vmatprep.mubr.bf16.mxu0 %v393
    %1283 = vmatmul.mubr.bf16.gmra.mrb[0].mxu0 %v392
    %v1284 = vpop.f32.mrb[0].mxu0
    %v1285 = vadd.f32 0.0, %v1284
    %v1286 = vpop.f32.mrb[0].mxu0
    %v1287 = vadd.f32 0.0, %v1286
    %v1288 = vpop.f32.mrb[0].mxu0
    %v1289 = vadd.f32 0.0, %v1288
    %v1290 = vpop.f32.mrb[0].mxu0
    %v1291 = vadd.f32 0.0, %v1290
    %1292 = vdwg.mxu0
    %1293 = vmatprep.subr.bf16.mxu0 %v975
    %1294 = vmatpush1.bf16.msra.mxu0 %v974
    %1295 = vmatprep.subr.bf16.mxu0 %v979
    %1296 = vmatpush1.bf16.msra.mxu0 %v978
    %1297 = vmatprep.subr.bf16.mxu0 %v983
    %1298 = vmatpush1.bf16.msra.mxu0 %v982
    %1299 = vmatprep.subr.bf16.mxu0 %v987
    %1300 = vmatpush1.bf16.msra.mxu0 %v986
    %1301 = vmatprep.subr.bf16.mxu0 %v991
    %1302 = vmatpush1.bf16.msra.mxu0 %v990
    %1303 = vmatprep.subr.bf16.mxu0 %v995
    %1304 = vmatpush1.bf16.msra.mxu0 %v994
    %1305 = vmatprep.subr.bf16.mxu0 %v999
    %1306 = vmatpush1.bf16.msra.mxu0 %v998
    %1307 = vmatprep.subr.bf16.mxu0 %v1003
    %1308 = vmatpush1.bf16.msra.mxu0 %v1002
    %1309 = vmatprep.subr.bf16.mxu0 %v1007
    %1310 = vmatpush1.bf16.msra.mxu0 %v1006
    %1311 = vmatprep.subr.bf16.mxu0 %v1011
    %1312 = vmatpush1.bf16.msra.mxu0 %v1010
    %1313 = vmatprep.subr.bf16.mxu0 %v1015
    %1314 = vmatpush1.bf16.msra.mxu0 %v1014
    %1315 = vmatprep.subr.bf16.mxu0 %v1019
    %1316 = vmatpush1.bf16.msra.mxu0 %v1018
    %1317 = vmatprep.subr.bf16.mxu0 %v1023
    %1318 = vmatpush1.bf16.msra.mxu0 %v1022
    %1319 = vmatprep.subr.bf16.mxu0 %v1027
    %1320 = vmatpush1.bf16.msra.mxu0 %v1026
    %1321 = vmatprep.subr.bf16.mxu0 %v1031
    %1322 = vmatpush1.bf16.msra.mxu0 %v1030
    %1323 = vmatprep.subr.bf16.mxu0 %v1035
    %1324 = vmatpush1.bf16.msra.mxu0 %v1034
    %1325 = vmatprep.mubr.bf16.mxu0 %v395
    %1326 = vmatmul.mubr.bf16.gmra.mrb[0].mxu0 %v394
    %v1327 = vpop.f32.mrb[0].mxu0
    %v1328 = vadd.f32 %v1285, %v1327
    %v1329 = vpop.f32.mrb[0].mxu0
    %v1330 = vadd.f32 %v1287, %v1329
    %v1331 = vpop.f32.mrb[0].mxu0
    %v1332 = vadd.f32 %v1289, %v1331
    %v1333 = vpop.f32.mrb[0].mxu0
    %v1334 = vadd.f32 %v1291, %v1333
    %1335 = vdwg.mxu0
    %v1336 = vpack.c.bf16 %v1246, %v1242
    %v1337 = vpack.c.bf16 %v1248, %v1244
    %v1338 = vpack.c.bf16 %v1332, %v1328
    %v1339 = vpack.c.bf16 %v1334, %v1330
    %v1340 = vld [vmem:[%s4] sm:$0xf]
    %v1343 = vunpack.c.l.s4 1966171168
    %v1344 = vunpack.c.0.s8 %v1343
    %v1345 = vlaneseq
    %v1346 = vshrl.u32 %v1345, 7
    %v1347 = vsub.s32 %v1344, %v1346
    %v1348 = vrot.slane %v1340, %v1347
    %v1349 = vcombine.high %v1348, %v1348
    %v1351 = vunpack.c.l.s4 1966171168
    %v1352 = vunpack.c.0.s8 %v1351
    %v1353 = vlaneseq
    %v1354 = vshrl.u32 %v1353, 7
    %v1355 = vsub.s32 %v1352, %v1354
    %v1356 = vrot.slane %v1348, %v1355
    %v1358 = vunpack.c.l.s4 1966171168
    %v1359 = vunpack.c.0.s8 %v1358
    %v1360 = vlaneseq
    %v1361 = vshrl.u32 %v1360, 7
    %v1362 = vsub.s32 %v1359, %v1361
    %v1363 = vrot.slane %v1349, %v1362
    %v1364 = vcombine.high %v1356, %v1356
    %v1365 = vcombine.high %v1363, %v1363
    %v1367 = vpack.i.b16 %v1356, %v1356
    %v1369 = vlaneseq
    %v1370 = vshrl.u32 %v1369, 7
    %v1371 = vsub.s32 0, %v1370
    %v1372 = vrot.slane %v1367, %v1371
    %v1374 = vpack.i.b16 %v1363, %v1363
    %v1376 = vlaneseq
    %v1377 = vshrl.u32 %v1376, 7
    %v1378 = vsub.s32 0, %v1377
    %v1379 = vrot.slane %v1374, %v1378
    %v1381 = vpack.i.b16 %v1364, %v1364
    %v1383 = vlaneseq
    %v1384 = vshrl.u32 %v1383, 7
    %v1385 = vsub.s32 0, %v1384
    %v1386 = vrot.slane %v1381, %v1385
    %v1388 = vpack.i.b16 %v1365, %v1365
    %v1390 = vlaneseq
    %v1391 = vshrl.u32 %v1390, 7
    %v1392 = vsub.s32 0, %v1391
    %v1393 = vrot.slane %v1388, %v1392
    %v1394 = vadd.bf16 %v1336, %v1372
    %v1395 = vadd.bf16 %v1337, %v1379
    %v1396 = vadd.bf16 %v1338, %v1386
    %v1397 = vadd.bf16 %v1339, %v1393
    %v1398 = vmul.bf16 %v1394, 1009007652
    %v1399 = vmul.bf16 %v1395, 1009007652
    %v1400 = vmul.bf16 %v1396, 1009007652
    %v1401 = vmul.bf16 %v1397, 1009007652
    %v1402 = vmax.bf16 %v1394, %v1398
    %v1403 = vmax.bf16 %v1395, %v1399
    %v1404 = vmax.bf16 %v1396, %v1400
    %v1405 = vmax.bf16 %v1397, %v1401
    %v1406 = vld [vmem:[#allocation6] sm:$0xff]
    %v1407 = vld [vmem:[#allocation6 + $0x8] sm:$0xff]
    %v1408 = vld [vmem:[#allocation6 + $0x10] sm:$0xff]
    %v1409 = vld [vmem:[#allocation6 + $0x18] sm:$0xff]
    %v1410 = vld [vmem:[#allocation6 + $0x20] sm:$0xff]
    %v1411 = vld [vmem:[#allocation6 + $0x28] sm:$0xff]
    %v1412 = vld [vmem:[#allocation6 + $0x30] sm:$0xff]
    %v1413 = vld [vmem:[#allocation6 + $0x38] sm:$0xff]
    %v1414 = vld [vmem:[#allocation6 + $0x40] sm:$0xff]
    %v1415 = vld [vmem:[#allocation6 + $0x48] sm:$0xff]
    %v1416 = vld [vmem:[#allocation6 + $0x50] sm:$0xff]
    %v1417 = vld [vmem:[#allocation6 + $0x58] sm:$0xff]
    %v1418 = vld [vmem:[#allocation6 + $0x60] sm:$0xff]
    %v1419 = vld [vmem:[#allocation6 + $0x68] sm:$0xff]
    %v1420 = vld [vmem:[#allocation6 + $0x70] sm:$0xff]
    %v1421 = vld [vmem:[#allocation6 + $0x78] sm:$0xff]
    %v1422 = vld [vmem:[#allocation6 + $0x80] sm:$0xff]
    %v1423 = vld [vmem:[#allocation6 + $0x88] sm:$0xff]
    %v1424 = vld [vmem:[#allocation6 + $0x90] sm:$0xff]
    %v1425 = vld [vmem:[#allocation6 + $0x98] sm:$0xff]
    %v1426 = vld [vmem:[#allocation6 + $0xa0] sm:$0xff]
    %v1427 = vld [vmem:[#allocation6 + $0xa8] sm:$0xff]
    %v1428 = vld [vmem:[#allocation6 + $0xb0] sm:$0xff]
    %v1429 = vld [vmem:[#allocation6 + $0xb8] sm:$0xff]
    %v1430 = vld [vmem:[#allocation6 + $0xc0] sm:$0xff]
    %v1431 = vld [vmem:[#allocation6 + $0xc8] sm:$0xff]
    %v1432 = vld [vmem:[#allocation6 + $0xd0] sm:$0xff]
    %v1433 = vld [vmem:[#allocation6 + $0xd8] sm:$0xff]
    %v1434 = vld [vmem:[#allocation6 + $0xe0] sm:$0xff]
    %v1435 = vld [vmem:[#allocation6 + $0xe8] sm:$0xff]
    %v1436 = vld [vmem:[#allocation6 + $0xf0] sm:$0xff]
    %v1437 = vld [vmem:[#allocation6 + $0xf8] sm:$0xff]
    %v1438 = vld [vmem:[#allocation6 + $0x100] sm:$0xff]
    %v1439 = vld [vmem:[#allocation6 + $0x108] sm:$0xff]
    %v1440 = vld [vmem:[#allocation6 + $0x110] sm:$0xff]
    %v1441 = vld [vmem:[#allocation6 + $0x118] sm:$0xff]
    %v1442 = vld [vmem:[#allocation6 + $0x120] sm:$0xff]
    %v1443 = vld [vmem:[#allocation6 + $0x128] sm:$0xff]
    %v1444 = vld [vmem:[#allocation6 + $0x130] sm:$0xff]
    %v1445 = vld [vmem:[#allocation6 + $0x138] sm:$0xff]
    %v1446 = vld [vmem:[#allocation6 + $0x140] sm:$0xff]
    %v1447 = vld [vmem:[#allocation6 + $0x148] sm:$0xff]
    %v1448 = vld [vmem:[#allocation6 + $0x150] sm:$0xff]
    %v1449 = vld [vmem:[#allocation6 + $0x158] sm:$0xff]
    %v1450 = vld [vmem:[#allocation6 + $0x160] sm:$0xff]
    %v1451 = vld [vmem:[#allocation6 + $0x168] sm:$0xff]
    %v1452 = vld [vmem:[#allocation6 + $0x170] sm:$0xff]
    %v1453 = vld [vmem:[#allocation6 + $0x178] sm:$0xff]
    %v1454 = vld [vmem:[#allocation6 + $0x180] sm:$0xff]
    %v1455 = vld [vmem:[#allocation6 + $0x188] sm:$0xff]
    %v1456 = vld [vmem:[#allocation6 + $0x190] sm:$0xff]
    %v1457 = vld [vmem:[#allocation6 + $0x198] sm:$0xff]
    %v1458 = vld [vmem:[#allocation6 + $0x1a0] sm:$0xff]
    %v1459 = vld [vmem:[#allocation6 + $0x1a8] sm:$0xff]
    %v1460 = vld [vmem:[#allocation6 + $0x1b0] sm:$0xff]
    %v1461 = vld [vmem:[#allocation6 + $0x1b8] sm:$0xff]
    %v1462 = vld [vmem:[#allocation6 + $0x1c0] sm:$0xff]
    %v1463 = vld [vmem:[#allocation6 + $0x1c8] sm:$0xff]
    %v1464 = vld [vmem:[#allocation6 + $0x1d0] sm:$0xff]
    %v1465 = vld [vmem:[#allocation6 + $0x1d8] sm:$0xff]
    %v1466 = vld [vmem:[#allocation6 + $0x1e0] sm:$0xff]
    %v1467 = vld [vmem:[#allocation6 + $0x1e8] sm:$0xff]
    %v1468 = vld [vmem:[#allocation6 + $0x1f0] sm:$0xff]
    %v1469 = vld [vmem:[#allocation6 + $0x1f8] sm:$0xff]
    %v1534 = vunpack.c.l.b16 %v1406
    %v1535 = vunpack.c.h.b16 %v1406
    %v1536 = vunpack.c.l.b16 %v1407
    %v1537 = vunpack.c.h.b16 %v1407
    %v1538 = vunpack.c.l.b16 %v1408
    %v1539 = vunpack.c.h.b16 %v1408
    %v1540 = vunpack.c.l.b16 %v1409
    %v1541 = vunpack.c.h.b16 %v1409
    %v1542 = vunpack.c.l.b16 %v1410
    %v1543 = vunpack.c.h.b16 %v1410
    %v1544 = vunpack.c.l.b16 %v1411
    %v1545 = vunpack.c.h.b16 %v1411
    %v1546 = vunpack.c.l.b16 %v1412
    %v1547 = vunpack.c.h.b16 %v1412
    %v1548 = vunpack.c.l.b16 %v1413
    %v1549 = vunpack.c.h.b16 %v1413
    %v1550 = vunpack.c.l.b16 %v1414
    %v1551 = vunpack.c.h.b16 %v1414
    %v1552 = vunpack.c.l.b16 %v1415
    %v1553 = vunpack.c.h.b16 %v1415
    %v1554 = vunpack.c.l.b16 %v1416
    %v1555 = vunpack.c.h.b16 %v1416
    %v1556 = vunpack.c.l.b16 %v1417
    %v1557 = vunpack.c.h.b16 %v1417
    %v1558 = vunpack.c.l.b16 %v1418
    %v1559 = vunpack.c.h.b16 %v1418
    %v1560 = vunpack.c.l.b16 %v1419
    %v1561 = vunpack.c.h.b16 %v1419
    %v1562 = vunpack.c.l.b16 %v1420
    %v1563 = vunpack.c.h.b16 %v1420
    %v1564 = vunpack.c.l.b16 %v1421
    %v1565 = vunpack.c.h.b16 %v1421
    %v1566 = vunpack.c.l.b16 %v1422
    %v1567 = vunpack.c.h.b16 %v1422
    %v1568 = vunpack.c.l.b16 %v1423
    %v1569 = vunpack.c.h.b16 %v1423
    %v1570 = vunpack.c.l.b16 %v1424
    %v1571 = vunpack.c.h.b16 %v1424
    %v1572 = vunpack.c.l.b16 %v1425
    %v1573 = vunpack.c.h.b16 %v1425
    %v1574 = vunpack.c.l.b16 %v1426
    %v1575 = vunpack.c.h.b16 %v1426
    %v1576 = vunpack.c.l.b16 %v1427
    %v1577 = vunpack.c.h.b16 %v1427
    %v1578 = vunpack.c.l.b16 %v1428
    %v1579 = vunpack.c.h.b16 %v1428
    %v1580 = vunpack.c.l.b16 %v1429
    %v1581 = vunpack.c.h.b16 %v1429
    %v1582 = vunpack.c.l.b16 %v1430
    %v1583 = vunpack.c.h.b16 %v1430
    %v1584 = vunpack.c.l.b16 %v1431
    %v1585 = vunpack.c.h.b16 %v1431
    %v1586 = vunpack.c.l.b16 %v1432
    %v1587 = vunpack.c.h.b16 %v1432
    %v1588 = vunpack.c.l.b16 %v1433
    %v1589 = vunpack.c.h.b16 %v1433
    %v1590 = vunpack.c.l.b16 %v1434
    %v1591 = vunpack.c.h.b16 %v1434
    %v1592 = vunpack.c.l.b16 %v1435
    %v1593 = vunpack.c.h.b16 %v1435
    %v1594 = vunpack.c.l.b16 %v1436
    %v1595 = vunpack.c.h.b16 %v1436
    %v1596 = vunpack.c.l.b16 %v1437
    %v1597 = vunpack.c.h.b16 %v1437
    %v1598 = vunpack.c.l.b16 %v1438
    %v1599 = vunpack.c.h.b16 %v1438
    %v1600 = vunpack.c.l.b16 %v1439
    %v1601 = vunpack.c.h.b16 %v1439
    %v1602 = vunpack.c.l.b16 %v1440
    %v1603 = vunpack.c.h.b16 %v1440
    %v1604 = vunpack.c.l.b16 %v1441
    %v1605 = vunpack.c.h.b16 %v1441
    %v1606 = vunpack.c.l.b16 %v1442
    %v1607 = vunpack.c.h.b16 %v1442
    %v1608 = vunpack.c.l.b16 %v1443
    %v1609 = vunpack.c.h.b16 %v1443
    %v1610 = vunpack.c.l.b16 %v1444
    %v1611 = vunpack.c.h.b16 %v1444
    %v1612 = vunpack.c.l.b16 %v1445
    %v1613 = vunpack.c.h.b16 %v1445
    %v1614 = vunpack.c.l.b16 %v1446
    %v1615 = vunpack.c.h.b16 %v1446
    %v1616 = vunpack.c.l.b16 %v1447
    %v1617 = vunpack.c.h.b16 %v1447
    %v1618 = vunpack.c.l.b16 %v1448
    %v1619 = vunpack.c.h.b16 %v1448
    %v1620 = vunpack.c.l.b16 %v1449
    %v1621 = vunpack.c.h.b16 %v1449
    %v1622 = vunpack.c.l.b16 %v1450
    %v1623 = vunpack.c.h.b16 %v1450
    %v1624 = vunpack.c.l.b16 %v1451
    %v1625 = vunpack.c.h.b16 %v1451
    %v1626 = vunpack.c.l.b16 %v1452
    %v1627 = vunpack.c.h.b16 %v1452
    %v1628 = vunpack.c.l.b16 %v1453
    %v1629 = vunpack.c.h.b16 %v1453
    %v1630 = vunpack.c.l.b16 %v1454
    %v1631 = vunpack.c.h.b16 %v1454
    %v1632 = vunpack.c.l.b16 %v1455
    %v1633 = vunpack.c.h.b16 %v1455
    %v1634 = vunpack.c.l.b16 %v1456
    %v1635 = vunpack.c.h.b16 %v1456
    %v1636 = vunpack.c.l.b16 %v1457
    %v1637 = vunpack.c.h.b16 %v1457
    %v1638 = vunpack.c.l.b16 %v1458
    %v1639 = vunpack.c.h.b16 %v1458
    %v1640 = vunpack.c.l.b16 %v1459
    %v1641 = vunpack.c.h.b16 %v1459
    %v1642 = vunpack.c.l.b16 %v1460
    %v1643 = vunpack.c.h.b16 %v1460
    %v1644 = vunpack.c.l.b16 %v1461
    %v1645 = vunpack.c.h.b16 %v1461
    %v1646 = vunpack.c.l.b16 %v1462
    %v1647 = vunpack.c.h.b16 %v1462
    %v1648 = vunpack.c.l.b16 %v1463
    %v1649 = vunpack.c.h.b16 %v1463
    %v1650 = vunpack.c.l.b16 %v1464
    %v1651 = vunpack.c.h.b16 %v1464
    %v1652 = vunpack.c.l.b16 %v1465
    %v1653 = vunpack.c.h.b16 %v1465
    %v1654 = vunpack.c.l.b16 %v1466
    %v1655 = vunpack.c.h.b16 %v1466
    %v1656 = vunpack.c.l.b16 %v1467
    %v1657 = vunpack.c.h.b16 %v1467
    %v1658 = vunpack.c.l.b16 %v1468
    %v1659 = vunpack.c.h.b16 %v1468
    %v1660 = vunpack.c.l.b16 %v1469
    %v1661 = vunpack.c.h.b16 %v1469
    %v1662 = vpack.c.b16 %v1536, %v1534
    %v1663 = vpack.c.b16 %v1537, %v1535
    %v1664 = vpack.c.b16 %v1540, %v1538
    %v1665 = vpack.c.b16 %v1541, %v1539
    %v1666 = vpack.c.b16 %v1544, %v1542
    %v1667 = vpack.c.b16 %v1545, %v1543
    %v1668 = vpack.c.b16 %v1548, %v1546
    %v1669 = vpack.c.b16 %v1549, %v1547
    %v1670 = vpack.c.b16 %v1552, %v1550
    %v1671 = vpack.c.b16 %v1553, %v1551
    %v1672 = vpack.c.b16 %v1556, %v1554
    %v1673 = vpack.c.b16 %v1557, %v1555
    %v1674 = vpack.c.b16 %v1560, %v1558
    %v1675 = vpack.c.b16 %v1561, %v1559
    %v1676 = vpack.c.b16 %v1564, %v1562
    %v1677 = vpack.c.b16 %v1565, %v1563
    %v1678 = vpack.c.b16 %v1568, %v1566
    %v1679 = vpack.c.b16 %v1569, %v1567
    %v1680 = vpack.c.b16 %v1572, %v1570
    %v1681 = vpack.c.b16 %v1573, %v1571
    %v1682 = vpack.c.b16 %v1576, %v1574
    %v1683 = vpack.c.b16 %v1577, %v1575
    %v1684 = vpack.c.b16 %v1580, %v1578
    %v1685 = vpack.c.b16 %v1581, %v1579
    %v1686 = vpack.c.b16 %v1584, %v1582
    %v1687 = vpack.c.b16 %v1585, %v1583
    %v1688 = vpack.c.b16 %v1588, %v1586
    %v1689 = vpack.c.b16 %v1589, %v1587
    %v1690 = vpack.c.b16 %v1592, %v1590
    %v1691 = vpack.c.b16 %v1593, %v1591
    %v1692 = vpack.c.b16 %v1596, %v1594
    %v1693 = vpack.c.b16 %v1597, %v1595
    %v1694 = vpack.c.b16 %v1600, %v1598
    %v1695 = vpack.c.b16 %v1601, %v1599
    %v1696 = vpack.c.b16 %v1604, %v1602
    %v1697 = vpack.c.b16 %v1605, %v1603
    %v1698 = vpack.c.b16 %v1608, %v1606
    %v1699 = vpack.c.b16 %v1609, %v1607
    %v1700 = vpack.c.b16 %v1612, %v1610
    %v1701 = vpack.c.b16 %v1613, %v1611
    %v1702 = vpack.c.b16 %v1616, %v1614
    %v1703 = vpack.c.b16 %v1617, %v1615
    %v1704 = vpack.c.b16 %v1620, %v1618
    %v1705 = vpack.c.b16 %v1621, %v1619
    %v1706 = vpack.c.b16 %v1624, %v1622
    %v1707 = vpack.c.b16 %v1625, %v1623
    %v1708 = vpack.c.b16 %v1628, %v1626
    %v1709 = vpack.c.b16 %v1629, %v1627
    %v1710 = vpack.c.b16 %v1632, %v1630
    %v1711 = vpack.c.b16 %v1633, %v1631
    %v1712 = vpack.c.b16 %v1636, %v1634
    %v1713 = vpack.c.b16 %v1637, %v1635
    %v1714 = vpack.c.b16 %v1640, %v1638
    %v1715 = vpack.c.b16 %v1641, %v1639
    %v1716 = vpack.c.b16 %v1644, %v1642
    %v1717 = vpack.c.b16 %v1645, %v1643
    %v1718 = vpack.c.b16 %v1648, %v1646
    %v1719 = vpack.c.b16 %v1649, %v1647
    %v1720 = vpack.c.b16 %v1652, %v1650
    %v1721 = vpack.c.b16 %v1653, %v1651
    %v1722 = vpack.c.b16 %v1656, %v1654
    %v1723 = vpack.c.b16 %v1657, %v1655
    %v1724 = vpack.c.b16 %v1660, %v1658
    %v1725 = vpack.c.b16 %v1661, %v1659
    %1790 = vmatprep.subr.bf16.mxu0 %v1663
    %1791 = vmatpush1.bf16.msra.mxu0 %v1662
    %1792 = vmatprep.subr.bf16.mxu0 %v1665
    %1793 = vmatpush1.bf16.msra.mxu0 %v1664
    %1794 = vmatprep.subr.bf16.mxu0 %v1667
    %1795 = vmatpush1.bf16.msra.mxu0 %v1666
    %1796 = vmatprep.subr.bf16.mxu0 %v1669
    %1797 = vmatpush1.bf16.msra.mxu0 %v1668
    %1798 = vmatprep.subr.bf16.mxu0 %v1671
    %1799 = vmatpush1.bf16.msra.mxu0 %v1670
    %1800 = vmatprep.subr.bf16.mxu0 %v1673
    %1801 = vmatpush1.bf16.msra.mxu0 %v1672
    %1802 = vmatprep.subr.bf16.mxu0 %v1675
    %1803 = vmatpush1.bf16.msra.mxu0 %v1674
    %1804 = vmatprep.subr.bf16.mxu0 %v1677
    %1805 = vmatpush1.bf16.msra.mxu0 %v1676
    %1806 = vmatprep.subr.bf16.mxu0 %v1679
    %1807 = vmatpush1.bf16.msra.mxu0 %v1678
    %1808 = vmatprep.subr.bf16.mxu0 %v1681
    %1809 = vmatpush1.bf16.msra.mxu0 %v1680
    %1810 = vmatprep.subr.bf16.mxu0 %v1683
    %1811 = vmatpush1.bf16.msra.mxu0 %v1682
    %1812 = vmatprep.subr.bf16.mxu0 %v1685
    %1813 = vmatpush1.bf16.msra.mxu0 %v1684
    %1814 = vmatprep.subr.bf16.mxu0 %v1687
    %1815 = vmatpush1.bf16.msra.mxu0 %v1686
    %1816 = vmatprep.subr.bf16.mxu0 %v1689
    %1817 = vmatpush1.bf16.msra.mxu0 %v1688
    %1818 = vmatprep.subr.bf16.mxu0 %v1691
    %1819 = vmatpush1.bf16.msra.mxu0 %v1690
    %1820 = vmatprep.subr.bf16.mxu0 %v1693
    %1821 = vmatpush1.bf16.msra.mxu0 %v1692
    %1822 = vmatprep.mubr.bf16.mxu0 %v1403
    %1823 = vmatmul.mubr.bf16.gmra.mrb[0].mxu0 %v1402
    %v1824 = vpop.f32.mrb[0].mxu0
    %v1825 = vadd.f32 0.0, %v1824
    %v1826 = vpop.f32.mrb[0].mxu0
    %v1827 = vadd.f32 0.0, %v1826
    %v1828 = vpop.f32.mrb[0].mxu0
    %v1829 = vadd.f32 0.0, %v1828
    %v1830 = vpop.f32.mrb[0].mxu0
    %v1831 = vadd.f32 0.0, %v1830
    %1832 = vdwg.mxu0
    %1833 = vmatprep.subr.bf16.mxu0 %v1695
    %1834 = vmatpush1.bf16.msra.mxu0 %v1694
    %1835 = vmatprep.subr.bf16.mxu0 %v1697
    %1836 = vmatpush1.bf16.msra.mxu0 %v1696
    %1837 = vmatprep.subr.bf16.mxu0 %v1699
    %1838 = vmatpush1.bf16.msra.mxu0 %v1698
    %1839 = vmatprep.subr.bf16.mxu0 %v1701
    %1840 = vmatpush1.bf16.msra.mxu0 %v1700
    %1841 = vmatprep.subr.bf16.mxu0 %v1703
    %1842 = vmatpush1.bf16.msra.mxu0 %v1702
    %1843 = vmatprep.subr.bf16.mxu0 %v1705
    %1844 = vmatpush1.bf16.msra.mxu0 %v1704
    %1845 = vmatprep.subr.bf16.mxu0 %v1707
    %1846 = vmatpush1.bf16.msra.mxu0 %v1706
    %1847 = vmatprep.subr.bf16.mxu0 %v1709
    %1848 = vmatpush1.bf16.msra.mxu0 %v1708
    %1849 = vmatprep.subr.bf16.mxu0 %v1711
    %1850 = vmatpush1.bf16.msra.mxu0 %v1710
    %1851 = vmatprep.subr.bf16.mxu0 %v1713
    %1852 = vmatpush1.bf16.msra.mxu0 %v1712
    %1853 = vmatprep.subr.bf16.mxu0 %v1715
    %1854 = vmatpush1.bf16.msra.mxu0 %v1714
    %1855 = vmatprep.subr.bf16.mxu0 %v1717
    %1856 = vmatpush1.bf16.msra.mxu0 %v1716
    %1857 = vmatprep.subr.bf16.mxu0 %v1719
    %1858 = vmatpush1.bf16.msra.mxu0 %v1718
    %1859 = vmatprep.subr.bf16.mxu0 %v1721
    %1860 = vmatpush1.bf16.msra.mxu0 %v1720
    %1861 = vmatprep.subr.bf16.mxu0 %v1723
    %1862 = vmatpush1.bf16.msra.mxu0 %v1722
    %1863 = vmatprep.subr.bf16.mxu0 %v1725
    %1864 = vmatpush1.bf16.msra.mxu0 %v1724
    %1865 = vmatprep.mubr.bf16.mxu0 %v1405
    %1866 = vmatmul.mubr.bf16.gmra.mrb[0].mxu0 %v1404
    %v1867 = vpop.f32.mrb[0].mxu0
    %v1868 = vadd.f32 %v1825, %v1867
    %v1869 = vpop.f32.mrb[0].mxu0
    %v1870 = vadd.f32 %v1827, %v1869
    %v1871 = vpop.f32.mrb[0].mxu0
    %v1872 = vadd.f32 %v1829, %v1871
    %v1873 = vpop.f32.mrb[0].mxu0
    %v1874 = vadd.f32 %v1831, %v1873
    %1875 = vdwg.mxu0
    %v1876 = vpack.c.bf16 %v1872, %v1868
    %v1877 = vpack.c.bf16 %v1874, %v1870
    %v1878 = vld [vmem:[%s6] sm:$0x3]
    %v1881 = vunpack.c.l.s4 1966171168
    %v1882 = vunpack.c.0.s8 %v1881
    %v1883 = vlaneseq
    %v1884 = vshrl.u32 %v1883, 7
    %v1885 = vsub.s32 %v1882, %v1884
    %v1886 = vrot.slane %v1878, %v1885
    %v1887 = vcombine.high %v1886, %v1886
    %v1889 = vunpack.c.l.s4 1966171168
    %v1890 = vunpack.c.0.s8 %v1889
    %v1891 = vlaneseq
    %v1892 = vshrl.u32 %v1891, 7
    %v1893 = vsub.s32 %v1890, %v1892
    %v1894 = vrot.slane %v1886, %v1893
    %v1896 = vunpack.c.l.s4 1966171168
    %v1897 = vunpack.c.0.s8 %v1896
    %v1898 = vlaneseq
    %v1899 = vshrl.u32 %v1898, 7
    %v1900 = vsub.s32 %v1897, %v1899
    %v1901 = vrot.slane %v1887, %v1900
    %v1903 = vpack.i.b16 %v1894, %v1894
    %v1905 = vlaneseq
    %v1906 = vshrl.u32 %v1905, 7
    %v1907 = vsub.s32 0, %v1906
    %v1908 = vrot.slane %v1903, %v1907
    %v1910 = vpack.i.b16 %v1901, %v1901
    %v1912 = vlaneseq
    %v1913 = vshrl.u32 %v1912, 7
    %v1914 = vsub.s32 0, %v1913
    %v1915 = vrot.slane %v1910, %v1914
    %v1916 = vadd.bf16 %v1876, %v1908
    %v1917 = vadd.bf16 %v1877, %v1915
    %v1918 = vmul.bf16 %v1916, 1009007652
    %v1919 = vmul.bf16 %v1917, 1009007652
    %v1920 = vmax.bf16 %v1916, %v1918
    %v1921 = vmax.bf16 %v1917, %v1919
    %v1922 = vld [vmem:[#allocation7] sm:$0xf]
    %v1923 = vld [vmem:[#allocation7 + $0x4] sm:$0xf]
    %v1924 = vld [vmem:[#allocation7 + $0x8] sm:$0xf]
    %v1925 = vld [vmem:[#allocation7 + $0xc] sm:$0xf]
    %v1926 = vld [vmem:[#allocation7 + $0x10] sm:$0xf]
    %v1927 = vld [vmem:[#allocation7 + $0x14] sm:$0xf]
    %v1928 = vld [vmem:[#allocation7 + $0x18] sm:$0xf]
    %v1929 = vld [vmem:[#allocation7 + $0x1c] sm:$0xf]
    %v1930 = vld [vmem:[#allocation7 + $0x20] sm:$0xf]
    %v1931 = vld [vmem:[#allocation7 + $0x24] sm:$0xf]
    %v1932 = vld [vmem:[#allocation7 + $0x28] sm:$0xf]
    %v1933 = vld [vmem:[#allocation7 + $0x2c] sm:$0xf]
    %v1934 = vld [vmem:[#allocation7 + $0x30] sm:$0xf]
    %v1935 = vld [vmem:[#allocation7 + $0x34] sm:$0xf]
    %v1936 = vld [vmem:[#allocation7 + $0x38] sm:$0xf]
    %v1937 = vld [vmem:[#allocation7 + $0x3c] sm:$0xf]
    %v1938 = vld [vmem:[#allocation7 + $0x40] sm:$0xf]
    %v1939 = vld [vmem:[#allocation7 + $0x44] sm:$0xf]
    %v1940 = vld [vmem:[#allocation7 + $0x48] sm:$0xf]
    %v1941 = vld [vmem:[#allocation7 + $0x4c] sm:$0xf]
    %v1942 = vld [vmem:[#allocation7 + $0x50] sm:$0xf]
    %v1943 = vld [vmem:[#allocation7 + $0x54] sm:$0xf]
    %v1944 = vld [vmem:[#allocation7 + $0x58] sm:$0xf]
    %v1945 = vld [vmem:[#allocation7 + $0x5c] sm:$0xf]
    %v1946 = vld [vmem:[#allocation7 + $0x60] sm:$0xf]
    %v1947 = vld [vmem:[#allocation7 + $0x64] sm:$0xf]
    %v1948 = vld [vmem:[#allocation7 + $0x68] sm:$0xf]
    %v1949 = vld [vmem:[#allocation7 + $0x6c] sm:$0xf]
    %v1950 = vld [vmem:[#allocation7 + $0x70] sm:$0xf]
    %v1951 = vld [vmem:[#allocation7 + $0x74] sm:$0xf]
    %v1952 = vld [vmem:[#allocation7 + $0x78] sm:$0xf]
    %v1953 = vld [vmem:[#allocation7 + $0x7c] sm:$0xf]
    %v1954 = vld [vmem:[%s8] sm:$0x1]
    %v1956 = vlaneseq
    %v1957 = vshrl.u32 %v1956, 7
    %v1958 = vsub.s32 0, %v1957
    %v1959 = vrot.slane %v1954, %v1958
    %v1993 = vunpack.c.l.b16 %v1922
    %v1994 = vunpack.c.l.b16 %v1923
    %v1995 = vunpack.c.l.b16 %v1924
    %v1996 = vunpack.c.l.b16 %v1925
    %v1997 = vunpack.c.l.b16 %v1926
    %v1998 = vunpack.c.l.b16 %v1927
    %v1999 = vunpack.c.l.b16 %v1928
    %v2000 = vunpack.c.l.b16 %v1929
    %v2001 = vunpack.c.l.b16 %v1930
    %v2002 = vunpack.c.l.b16 %v1931
    %v2003 = vunpack.c.l.b16 %v1932
    %v2004 = vunpack.c.l.b16 %v1933
    %v2005 = vunpack.c.l.b16 %v1934
    %v2006 = vunpack.c.l.b16 %v1935
    %v2007 = vunpack.c.l.b16 %v1936
    %v2008 = vunpack.c.l.b16 %v1937
    %v2009 = vunpack.c.l.b16 %v1938
    %v2010 = vunpack.c.l.b16 %v1939
    %v2011 = vunpack.c.l.b16 %v1940
    %v2012 = vunpack.c.l.b16 %v1941
    %v2013 = vunpack.c.l.b16 %v1942
    %v2014 = vunpack.c.l.b16 %v1943
    %v2015 = vunpack.c.l.b16 %v1944
    %v2016 = vunpack.c.l.b16 %v1945
    %v2017 = vunpack.c.l.b16 %v1946
    %v2018 = vunpack.c.l.b16 %v1947
    %v2019 = vunpack.c.l.b16 %v1948
    %v2020 = vunpack.c.l.b16 %v1949
    %v2021 = vunpack.c.l.b16 %v1950
    %v2022 = vunpack.c.l.b16 %v1951
    %v2023 = vunpack.c.l.b16 %v1952
    %v2024 = vunpack.c.l.b16 %v1953
    %v2025 = vpack.c.b16 %v1994, %v1993
    %v2026 = vpack.c.b16 %v1996, %v1995
    %v2027 = vpack.c.b16 %v1998, %v1997
    %v2028 = vpack.c.b16 %v2000, %v1999
    %v2029 = vpack.c.b16 %v2002, %v2001
    %v2030 = vpack.c.b16 %v2004, %v2003
    %v2031 = vpack.c.b16 %v2006, %v2005
    %v2032 = vpack.c.b16 %v2008, %v2007
    %v2033 = vpack.c.b16 %v2010, %v2009
    %v2034 = vpack.c.b16 %v2012, %v2011
    %v2035 = vpack.c.b16 %v2014, %v2013
    %v2036 = vpack.c.b16 %v2016, %v2015
    %v2037 = vpack.c.b16 %v2018, %v2017
    %v2038 = vpack.c.b16 %v2020, %v2019
    %v2039 = vpack.c.b16 %v2022, %v2021
    %v2040 = vpack.c.b16 %v2024, %v2023
    %2057 = vmatprep.subr.bf16.mxu0 0
    %2058 = vmatpush1.bf16.msra.mxu0 %v2025
    %2059 = vmatprep.subr.bf16.mxu0 0
    %2060 = vmatpush1.bf16.msra.mxu0 %v2026
    %2061 = vmatprep.subr.bf16.mxu0 0
    %2062 = vmatpush1.bf16.msra.mxu0 %v2027
    %2063 = vmatprep.subr.bf16.mxu0 0
    %2064 = vmatpush1.bf16.msra.mxu0 %v2028
    %2065 = vmatprep.subr.bf16.mxu0 0
    %2066 = vmatpush1.bf16.msra.mxu0 %v2029
    %2067 = vmatprep.subr.bf16.mxu0 0
    %2068 = vmatpush1.bf16.msra.mxu0 %v2030
    %2069 = vmatprep.subr.bf16.mxu0 0
    %2070 = vmatpush1.bf16.msra.mxu0 %v2031
    %2071 = vmatprep.subr.bf16.mxu0 0
    %2072 = vmatpush1.bf16.msra.mxu0 %v2032
    %2073 = vmatprep.subr.bf16.mxu0 0
    %2074 = vmatpush1.bf16.msra.mxu0 %v2033
    %2075 = vmatprep.subr.bf16.mxu0 0
    %2076 = vmatpush1.bf16.msra.mxu0 %v2034
    %2077 = vmatprep.subr.bf16.mxu0 0
    %2078 = vmatpush1.bf16.msra.mxu0 %v2035
    %2079 = vmatprep.subr.bf16.mxu0 0
    %2080 = vmatpush1.bf16.msra.mxu0 %v2036
    %2081 = vmatprep.subr.bf16.mxu0 0
    %2082 = vmatpush1.bf16.msra.mxu0 %v2037
    %2083 = vmatprep.subr.bf16.mxu0 0
    %2084 = vmatpush1.bf16.msra.mxu0 %v2038
    %2085 = vmatprep.subr.bf16.mxu0 0
    %2086 = vmatpush1.bf16.msra.mxu0 %v2039
    %2087 = vmatprep.subr.bf16.mxu0 0
    %2088 = vmatpush1.bf16.msra.mxu0 %v2040
    %2089 = vmatprep.mubr.bf16.mxu0 %v1921
    %2090 = vmatmul.mubr.bf16.gmra.mrb[0].mxu0 %v1920
    %v2091 = vpop.f32.mrb[0].mxu0
    %v2092 = vadd.f32 %v1959, %v2091
    %v2093 = vpop.f32.mrb[0].mxu0
    %v2094 = vpop.f32.mrb[0].mxu0
    %v2095 = vadd.f32 %v1959, %v2094
    %v2096 = vpop.f32.mrb[0].mxu0
    %2097 = vdwg.mxu0
    %2098 = vst [vmem:[%s9] sm:$0xff] %v2092
    %2099 = vst [vmem:[%s9 + $0x8] sm:$0xff] %v2095
    // Predicated region
    $region54: #{discriminator_forward.1} parent=1 // pred_check
      _
    $region55: #{discriminator_forward.1} parent=1 // pred_check_branch
      %2101 = sbr.rel (0) target = $region57
    $region56: #{discriminator_forward.1} parent=1 // pred_region
      _
    $region57: #{discriminator_forward.1} parent=1 // pred_fallthru
      _
    // Predicated region
    $region58: #{discriminator_forward.1} parent=1 // pred_check
      _
    $region59: #{discriminator_forward.1} parent=1 // pred_check_branch
      %2103 = sbr.rel (0) target = $region61
    $region60: #{discriminator_forward.1} parent=1 // pred_region
      _
    $region61: #{discriminator_forward.1} parent=1 // pred_fallthru
      _
    %2104 = vsyncpa [#allocation3], 1
    %2105 = vsyncpa [#allocation5], 1
    %2106 = vsyncpa [#allocation8], 1

</llo_original>
